<compile_context>
chip_gen: v7x
topology: tpu7x:2x2x1
jax: 0.10.0
libtpu: 0.0.40
codegen_flags: <defaults>
</compile_context>

<pallas_src>
import functools

import jax
import jax.numpy as jnp
import numpy as np
from jax import lax
from jax.experimental import pallas as pl
from jax.experimental.pallas import tpu as pltpu


def _round_up(n, m):
    return ((n + m - 1) // m) * m


def _decoder_kernel(gx_ref, whh_ref, wout_ref, bout_ref, out_ref,
                    h_sc, c_sc, hs_sc, *, hidden_dim, t_chunk, unroll):
    """One grid step = one chunk of `t_chunk` timesteps.

    gx_ref   : (Bp, 4H)  precomputed x@W_ih^T + b_ih + b_hh (time-constant)
    whh_ref  : (H, 4H)   recurrent weight (pre-transposed)
    wout_ref : (H, F)    output projection weight (pre-transposed)
    bout_ref : (1, F)    output bias
    out_ref  : (Bp, t_chunk, F)  this chunk's output block (batch-major)
    h_sc/c_sc: (Bp, H)   LSTM state, persists across grid steps
    hs_sc    : (t_chunk, Bp, H)  hidden-state slab for the deferred projection
    """
    H = hidden_dim
    Bp = h_sc.shape[0]
    F = out_ref.shape[-1]

    @pl.when(pl.program_id(0) == 0)
    def _init():
        h_sc[...] = jnp.zeros_like(h_sc)
        c_sc[...] = jnp.zeros_like(c_sc)

    gx = gx_ref[...]        # (Bp, 4H), constant across time
    whh = whh_ref[...]      # (H, 4H)

    def step(t, carry):
        h, c = carry
        # gates = x@W_ih^T + b_ih + b_hh + h@W_hh^T   (PyTorch order i,f,g,o)
        gates = gx + jnp.dot(h, whh, preferred_element_type=jnp.float32)
        i = jax.nn.sigmoid(gates[:, 0 * H:1 * H])
        f = jax.nn.sigmoid(gates[:, 1 * H:2 * H])
        g = jnp.tanh(gates[:, 2 * H:3 * H])
        o = jax.nn.sigmoid(gates[:, 3 * H:4 * H])
        c_new = f * c + i * g
        h_new = o * jnp.tanh(c_new)
        hs_sc[t] = h_new                    # stash for deferred projection
        return h_new, c_new

    h_last, c_last = lax.fori_loop(0, t_chunk, step,
                                   (h_sc[...], c_sc[...]), unroll=unroll)
    h_sc[...] = h_last
    c_sc[...] = c_last

    # Deferred output projection: one large MXU matmul per chunk, then emit a
    # batch-major, lane-dense (Bp, t_chunk, F) block.
    hs = hs_sc[...].reshape(t_chunk * Bp, H)
    proj = jnp.dot(hs, wout_ref[...],
                   preferred_element_type=jnp.float32) + bout_ref[...]
    out_ref[...] = jnp.transpose(proj.reshape(t_chunk, Bp, F), (1, 0, 2))


def decoder_forward(x, y, params):
    """x: (B, 1, D) float32, y: python int (sequence length). Returns (B, y, F)."""
    B, one, D = x.shape
    assert one == 1
    w_ih = jnp.asarray(params["w_ih"], jnp.float32)    # (4H, D)
    b_ih = jnp.asarray(params["b_ih"], jnp.float32)    # (4H,)
    w_hh = jnp.asarray(params["w_hh"], jnp.float32)    # (4H, H)
    b_hh = jnp.asarray(params["b_hh"], jnp.float32)    # (4H,)
    w_out = jnp.asarray(params["w_out"], jnp.float32)  # (F, H)
    b_out = jnp.asarray(params["b_out"], jnp.float32)  # (F,)
    H = w_hh.shape[1]
    F = w_out.shape[0]

    # Input-gate term is constant across time (the input is repeated), so
    # compute it once with one tiny XLA matmul and pass it to the kernel.
    gx = x[:, 0, :].astype(jnp.float32) @ w_ih.T + (b_ih + b_hh)   # (B, 4H)

    # Pad batch to a full sublane group (8): unmasked vregs/stores; padded
    # rows have gx == 0 so they stay exactly zero through the recurrence.
    B_pad = _round_up(B, 8)
    gx_pad = jnp.zeros((B_pad, 4 * H), jnp.float32).at[:B].set(gx)

    whh_t = w_hh.T                    # (H, 4H)
    wout_t = w_out.T                  # (H, F)
    bout2 = b_out.reshape(1, F)

    # Time chunking: the whole recurrence runs inside the kernel; the
    # (sequential) grid only advances chunk-by-chunk. T_CHUNK multiple of 8.
    T_CHUNK = min(_round_up(y, 8), 64)
    num_chunks = -(-y // T_CHUNK)
    padded_T = num_chunks * T_CHUNK
    unroll = True if T_CHUNK <= 16 else 8

    out = pl.pallas_call(
        functools.partial(_decoder_kernel, hidden_dim=H,
                          t_chunk=T_CHUNK, unroll=unroll),
        out_shape=jax.ShapeDtypeStruct((B_pad, padded_T, F), jnp.float32),
        grid_spec=pltpu.PrefetchScalarGridSpec(
            num_scalar_prefetch=0,
            grid=(num_chunks,),
            in_specs=[
                # constant index_maps -> DMA'd once, no re-fetch per chunk
                pl.BlockSpec((B_pad, 4 * H), lambda c: (0, 0)),   # gx
                pl.BlockSpec((H, 4 * H), lambda c: (0, 0)),       # W_hh^T
                pl.BlockSpec((H, F), lambda c: (0, 0)),           # W_out^T
                pl.BlockSpec((1, F), lambda c: (0, 0)),           # b_out
            ],
            out_specs=pl.BlockSpec((B_pad, T_CHUNK, F), lambda c: (0, c, 0)),
            scratch_shapes=[
                pltpu.VMEM((B_pad, H), jnp.float32),              # h state
                pltpu.VMEM((B_pad, H), jnp.float32),              # c state
                pltpu.VMEM((T_CHUNK, B_pad, H), jnp.float32),     # h_t slab
            ],
        ),
        compiler_params=pltpu.CompilerParams(
            dimension_semantics=("arbitrary",)),   # time chunks are sequential
    )(gx_pad, whh_t, wout_t, bout2)

    return out[:B, :y, :]   # drop batch/time padding


def decoder_ref(x, y, params):
    """Pure-JAX reference matching PyTorch nn.LSTM + nn.Linear."""
    w_ih, b_ih, w_hh, b_hh, w_out, b_out = (
        params["w_ih"], params["b_ih"], params["w_hh"], params["b_hh"],
        params["w_out"], params["b_out"])
    B = x.shape[0]
    H = w_hh.shape[1]
    h = jnp.zeros((B, H), jnp.float32)
    c = jnp.zeros((B, H), jnp.float32)
    xt = x[:, 0, :]
    outs = []
    for _ in range(y):
        gates = xt @ w_ih.T + b_ih + h @ w_hh.T + b_hh
        i, f, g, o = jnp.split(gates, 4, axis=-1)
        i = jax.nn.sigmoid(i)
        f = jax.nn.sigmoid(f)
        g = jnp.tanh(g)
        o = jax.nn.sigmoid(o)
        c = f * c + i * g
        h = o * jnp.tanh(c)
        outs.append(h @ w_out.T + b_out)
    return jnp.stack(outs, axis=1)


def init_params(key, input_dim, n_features):
    """Deterministic init with shapes matching the PyTorch module."""
    H = 2 * input_dim
    k_lstm = 1.0 / np.sqrt(H)
    k_lin = 1.0 / np.sqrt(H)
    ks = jax.random.split(key, 6)
    u = lambda k, shape, s: jax.random.uniform(k, shape, jnp.float32, -s, s)
    return {
        "w_ih": u(ks[0], (4 * H, input_dim), k_lstm),
        "b_ih": u(ks[1], (4 * H,), k_lstm),
        "w_hh": u(ks[2], (4 * H, H), k_lstm),
        "b_hh": u(ks[3], (4 * H,), k_lstm),
        "w_out": u(ks[4], (n_features, H), k_lin),
        "b_out": u(ks[5], (n_features,), k_lin),
    }


if __name__ == "__main__":
    # small shapes consistent with the module: input_dim=64 -> hidden=128
    B, D, F, SEQ = 2, 64, 256, 8
    key = jax.random.PRNGKey(0)
    k_x, k_p = jax.random.split(key)

    params = init_params(k_p, input_dim=D, n_features=F)
    x = jax.random.normal(k_x, (B, 1, D), jnp.float32)

    out = decoder_forward(x, SEQ, params)
    out = jax.block_until_ready(out)

    ref = decoder_ref(x, SEQ, params)
    np.testing.assert_allclose(np.asarray(out), np.asarray(ref),
                               rtol=1e-5, atol=1e-5)
    assert out.shape == (B, SEQ, F)
    print("KERNEL_OK")
</pallas_src>

<mosaic_0001>
module attributes {stable_mosaic.version = 11 : i64} {
  func.func @_decoder_kernel(%arg0: i32, %arg1: memref<8x512xf32, #tpu.memory_space<vmem>>, %arg2: memref<128x512xf32, #tpu.memory_space<vmem>>, %arg3: memref<128x256xf32, #tpu.memory_space<vmem>>, %arg4: memref<1x256xf32, #tpu.memory_space<vmem>>, %arg5: memref<8x8x256xf32, #tpu.memory_space<vmem>>, %arg6: memref<8x128xf32, #tpu.memory_space<vmem>>, %arg7: memref<8x128xf32, #tpu.memory_space<vmem>>, %arg8: memref<8x8x128xf32, #tpu.memory_space<vmem>>) attributes {dimension_semantics = [#tpu.dimension_semantics<arbitrary>], iteration_bounds = array<i64: 1>, scalar_prefetch = 0 : i64, scratch_operands = 3 : i64, tpu.core_type = #tpu.core_type<tc>, window_params = [{pipeline_mode = #tpu.pipeline_mode<synchronous>, transform_indices = @transform_0, window_bounds = array<i64: 8, 512>}, {pipeline_mode = #tpu.pipeline_mode<synchronous>, transform_indices = @transform_1, window_bounds = array<i64: 128, 512>}, {pipeline_mode = #tpu.pipeline_mode<synchronous>, transform_indices = @transform_2, window_bounds = array<i64: 128, 256>}, {pipeline_mode = #tpu.pipeline_mode<synchronous>, transform_indices = @transform_3, window_bounds = array<i64: 1, 256>}, {transform_indices = @transform_4, window_bounds = array<i64: 8, 8, 256>}]} {
    %c0_i32 = arith.constant 0 : i32
    %0 = arith.cmpi eq, %arg0, %c0_i32 : i32
    %1 = arith.extui %0 : i1 to i32
    %c0_i32_0 = arith.constant 0 : i32
    %2 = arith.cmpi ne, %1, %c0_i32_0 : i32
    scf.if %2 {
      %cst_71 = arith.constant 0.000000e+00 : f32
      %267 = vector.broadcast %cst_71 : f32 to vector<8x128xf32>
      %c0_72 = arith.constant 0 : index
      %c0_73 = arith.constant 0 : index
      %268 = vector.load %arg6[%c0_72, %c0_73] : memref<8x128xf32, #tpu.memory_space<vmem>>, vector<8x128xf32>
      tpu.vector_store %arg6[%c0_72, %c0_73], %267 {strides = array<i32>} : memref<8x128xf32, #tpu.memory_space<vmem>>, vector<8x128xf32>,
      %cst_74 = arith.constant 0.000000e+00 : f32
      %269 = vector.broadcast %cst_74 : f32 to vector<8x128xf32>
      %c0_75 = arith.constant 0 : index
      %c0_76 = arith.constant 0 : index
      %270 = vector.load %arg7[%c0_75, %c0_76] : memref<8x128xf32, #tpu.memory_space<vmem>>, vector<8x128xf32>
      tpu.vector_store %arg7[%c0_75, %c0_76], %269 {strides = array<i32>} : memref<8x128xf32, #tpu.memory_space<vmem>>, vector<8x128xf32>,
    } else {
    }
    %c0 = arith.constant 0 : index
    %c0_1 = arith.constant 0 : index
    %3 = vector.load %arg1[%c0, %c0_1] : memref<8x512xf32, #tpu.memory_space<vmem>>, vector<8x512xf32>
    %c0_2 = arith.constant 0 : index
    %c0_3 = arith.constant 0 : index
    %4 = vector.load %arg2[%c0_2, %c0_3] : memref<128x512xf32, #tpu.memory_space<vmem>>, vector<128x512xf32>
    %c0_4 = arith.constant 0 : index
    %c0_5 = arith.constant 0 : index
    %5 = vector.load %arg6[%c0_4, %c0_5] : memref<8x128xf32, #tpu.memory_space<vmem>>, vector<8x128xf32>
    %c0_6 = arith.constant 0 : index
    %c0_7 = arith.constant 0 : index
    %6 = vector.load %arg7[%c0_6, %c0_7] : memref<8x128xf32, #tpu.memory_space<vmem>>, vector<8x128xf32>
    %c0_i32_8 = arith.constant 0 : i32
    %cst = arith.constant dense<0.000000e+00> : vector<8x512xf32>
    %7 = tpu.matmul %5, %4, %cst {dimension_numbers = #tpu.dot_dimension_numbers<[1], [0], [0], [1], [0, 0, 1, 1], [], []>} : vector<8x128xf32>, vector<128x512xf32>, vector<8x512xf32> -> vector<8x512xf32>
    %8 = arith.addf %3, %7 : vector<8x512xf32>
    %9 = vector.extract_strided_slice %8 {offsets = [0, 0], sizes = [8, 128], strides = [1, 1]} : vector<8x512xf32> to vector<8x128xf32>
    %10 = arith.negf %9 : vector<8x128xf32>
    %11 = math.exp %10 : vector<8x128xf32>
    %cst_9 = arith.constant 1.000000e+00 : f32
    %12 = vector.broadcast %cst_9 : f32 to vector<8x128xf32>
    %13 = arith.addf %12, %11 : vector<8x128xf32>
    %14 = arith.divf %12, %13 : vector<8x128xf32>
    %15 = vector.extract_strided_slice %8 {offsets = [0, 128], sizes = [8, 128], strides = [1, 1]} : vector<8x512xf32> to vector<8x128xf32>
    %16 = arith.negf %15 : vector<8x128xf32>
    %17 = math.exp %16 : vector<8x128xf32>
    %cst_10 = arith.constant 1.000000e+00 : f32
    %18 = vector.broadcast %cst_10 : f32 to vector<8x128xf32>
    %19 = arith.addf %18, %17 : vector<8x128xf32>
    %20 = arith.divf %18, %19 : vector<8x128xf32>
    %21 = vector.extract_strided_slice %8 {offsets = [0, 256], sizes = [8, 128], strides = [1, 1]} : vector<8x512xf32> to vector<8x128xf32>
    %22 = math.tanh %21 : vector<8x128xf32>
    %23 = vector.extract_strided_slice %8 {offsets = [0, 384], sizes = [8, 128], strides = [1, 1]} : vector<8x512xf32> to vector<8x128xf32>
    %24 = arith.negf %23 : vector<8x128xf32>
    %25 = math.exp %24 : vector<8x128xf32>
    %cst_11 = arith.constant 1.000000e+00 : f32
    %26 = vector.broadcast %cst_11 : f32 to vector<8x128xf32>
    %27 = arith.addf %26, %25 : vector<8x128xf32>
    %28 = arith.divf %26, %27 : vector<8x128xf32>
    %29 = arith.mulf %20, %6 : vector<8x128xf32>
    %30 = arith.mulf %14, %22 : vector<8x128xf32>
    %31 = arith.addf %29, %30 : vector<8x128xf32>
    %32 = math.tanh %31 : vector<8x128xf32>
    %33 = arith.mulf %28, %32 : vector<8x128xf32>
    %34 = arith.index_cast %c0_i32_8 : i32 to index
    %c0_12 = arith.constant 0 : index
    %c0_13 = arith.constant 0 : index
    %35 = vector.load %arg8[%34, %c0_12, %c0_13] : memref<8x8x128xf32, #tpu.memory_space<vmem>>, vector<1x8x128xf32>
    %36 = vector.shape_cast %35 : vector<1x8x128xf32> to vector<8x128xf32>
    %37 = vector.shape_cast %33 : vector<8x128xf32> to vector<1x8x128xf32>
    tpu.vector_store %arg8[%34, %c0_12, %c0_13], %37 {strides = array<i32>} : memref<8x8x128xf32, #tpu.memory_space<vmem>>, vector<1x8x128xf32>,
    %c1_i32 = arith.constant 1 : i32
    %cst_14 = arith.constant dense<0.000000e+00> : vector<8x512xf32>
    %38 = tpu.matmul %33, %4, %cst_14 {dimension_numbers = #tpu.dot_dimension_numbers<[1], [0], [0], [1], [0, 0, 1, 1], [], []>} : vector<8x128xf32>, vector<128x512xf32>, vector<8x512xf32> -> vector<8x512xf32>
    %39 = arith.addf %3, %38 : vector<8x512xf32>
    %40 = vector.extract_strided_slice %39 {offsets = [0, 0], sizes = [8, 128], strides = [1, 1]} : vector<8x512xf32> to vector<8x128xf32>
    %41 = arith.negf %40 : vector<8x128xf32>
    %42 = math.exp %41 : vector<8x128xf32>
    %cst_15 = arith.constant 1.000000e+00 : f32
    %43 = vector.broadcast %cst_15 : f32 to vector<8x128xf32>
    %44 = arith.addf %43, %42 : vector<8x128xf32>
    %45 = arith.divf %43, %44 : vector<8x128xf32>
    %46 = vector.extract_strided_slice %39 {offsets = [0, 128], sizes = [8, 128], strides = [1, 1]} : vector<8x512xf32> to vector<8x128xf32>
    %47 = arith.negf %46 : vector<8x128xf32>
    %48 = math.exp %47 : vector<8x128xf32>
    %cst_16 = arith.constant 1.000000e+00 : f32
    %49 = vector.broadcast %cst_16 : f32 to vector<8x128xf32>
    %50 = arith.addf %49, %48 : vector<8x128xf32>
    %51 = arith.divf %49, %50 : vector<8x128xf32>
    %52 = vector.extract_strided_slice %39 {offsets = [0, 256], sizes = [8, 128], strides = [1, 1]} : vector<8x512xf32> to vector<8x128xf32>
    %53 = math.tanh %52 : vector<8x128xf32>
    %54 = vector.extract_strided_slice %39 {offsets = [0, 384], sizes = [8, 128], strides = [1, 1]} : vector<8x512xf32> to vector<8x128xf32>
    %55 = arith.negf %54 : vector<8x128xf32>
    %56 = math.exp %55 : vector<8x128xf32>
    %cst_17 = arith.constant 1.000000e+00 : f32
    %57 = vector.broadcast %cst_17 : f32 to vector<8x128xf32>
    %58 = arith.addf %57, %56 : vector<8x128xf32>
    %59 = arith.divf %57, %58 : vector<8x128xf32>
    %60 = arith.mulf %51, %31 : vector<8x128xf32>
    %61 = arith.mulf %45, %53 : vector<8x128xf32>
    %62 = arith.addf %60, %61 : vector<8x128xf32>
    %63 = math.tanh %62 : vector<8x128xf32>
    %64 = arith.mulf %59, %63 : vector<8x128xf32>
    %65 = arith.index_cast %c1_i32 : i32 to index
    %c0_18 = arith.constant 0 : index
    %c0_19 = arith.constant 0 : index
    %66 = vector.load %arg8[%65, %c0_18, %c0_19] : memref<8x8x128xf32, #tpu.memory_space<vmem>>, vector<1x8x128xf32>
    %67 = vector.shape_cast %66 : vector<1x8x128xf32> to vector<8x128xf32>
    %68 = vector.shape_cast %64 : vector<8x128xf32> to vector<1x8x128xf32>
    tpu.vector_store %arg8[%65, %c0_18, %c0_19], %68 {strides = array<i32>} : memref<8x8x128xf32, #tpu.memory_space<vmem>>, vector<1x8x128xf32>,
    %c2_i32 = arith.constant 2 : i32
    %cst_20 = arith.constant dense<0.000000e+00> : vector<8x512xf32>
    %69 = tpu.matmul %64, %4, %cst_20 {dimension_numbers = #tpu.dot_dimension_numbers<[1], [0], [0], [1], [0, 0, 1, 1], [], []>} : vector<8x128xf32>, vector<128x512xf32>, vector<8x512xf32> -> vector<8x512xf32>
    %70 = arith.addf %3, %69 : vector<8x512xf32>
    %71 = vector.extract_strided_slice %70 {offsets = [0, 0], sizes = [8, 128], strides = [1, 1]} : vector<8x512xf32> to vector<8x128xf32>
    %72 = arith.negf %71 : vector<8x128xf32>
    %73 = math.exp %72 : vector<8x128xf32>
    %cst_21 = arith.constant 1.000000e+00 : f32
    %74 = vector.broadcast %cst_21 : f32 to vector<8x128xf32>
    %75 = arith.addf %74, %73 : vector<8x128xf32>
    %76 = arith.divf %74, %75 : vector<8x128xf32>
    %77 = vector.extract_strided_slice %70 {offsets = [0, 128], sizes = [8, 128], strides = [1, 1]} : vector<8x512xf32> to vector<8x128xf32>
    %78 = arith.negf %77 : vector<8x128xf32>
    %79 = math.exp %78 : vector<8x128xf32>
    %cst_22 = arith.constant 1.000000e+00 : f32
    %80 = vector.broadcast %cst_22 : f32 to vector<8x128xf32>
    %81 = arith.addf %80, %79 : vector<8x128xf32>
    %82 = arith.divf %80, %81 : vector<8x128xf32>
    %83 = vector.extract_strided_slice %70 {offsets = [0, 256], sizes = [8, 128], strides = [1, 1]} : vector<8x512xf32> to vector<8x128xf32>
    %84 = math.tanh %83 : vector<8x128xf32>
    %85 = vector.extract_strided_slice %70 {offsets = [0, 384], sizes = [8, 128], strides = [1, 1]} : vector<8x512xf32> to vector<8x128xf32>
    %86 = arith.negf %85 : vector<8x128xf32>
    %87 = math.exp %86 : vector<8x128xf32>
    %cst_23 = arith.constant 1.000000e+00 : f32
    %88 = vector.broadcast %cst_23 : f32 to vector<8x128xf32>
    %89 = arith.addf %88, %87 : vector<8x128xf32>
    %90 = arith.divf %88, %89 : vector<8x128xf32>
    %91 = arith.mulf %82, %62 : vector<8x128xf32>
    %92 = arith.mulf %76, %84 : vector<8x128xf32>
    %93 = arith.addf %91, %92 : vector<8x128xf32>
    %94 = math.tanh %93 : vector<8x128xf32>
    %95 = arith.mulf %90, %94 : vector<8x128xf32>
    %96 = arith.index_cast %c2_i32 : i32 to index
    %c0_24 = arith.constant 0 : index
    %c0_25 = arith.constant 0 : index
    %97 = vector.load %arg8[%96, %c0_24, %c0_25] : memref<8x8x128xf32, #tpu.memory_space<vmem>>, vector<1x8x128xf32>
    %98 = vector.shape_cast %97 : vector<1x8x128xf32> to vector<8x128xf32>
    %99 = vector.shape_cast %95 : vector<8x128xf32> to vector<1x8x128xf32>
    tpu.vector_store %arg8[%96, %c0_24, %c0_25], %99 {strides = array<i32>} : memref<8x8x128xf32, #tpu.memory_space<vmem>>, vector<1x8x128xf32>,
    %c3_i32 = arith.constant 3 : i32
    %cst_26 = arith.constant dense<0.000000e+00> : vector<8x512xf32>
    %100 = tpu.matmul %95, %4, %cst_26 {dimension_numbers = #tpu.dot_dimension_numbers<[1], [0], [0], [1], [0, 0, 1, 1], [], []>} : vector<8x128xf32>, vector<128x512xf32>, vector<8x512xf32> -> vector<8x512xf32>
    %101 = arith.addf %3, %100 : vector<8x512xf32>
    %102 = vector.extract_strided_slice %101 {offsets = [0, 0], sizes = [8, 128], strides = [1, 1]} : vector<8x512xf32> to vector<8x128xf32>
    %103 = arith.negf %102 : vector<8x128xf32>
    %104 = math.exp %103 : vector<8x128xf32>
    %cst_27 = arith.constant 1.000000e+00 : f32
    %105 = vector.broadcast %cst_27 : f32 to vector<8x128xf32>
    %106 = arith.addf %105, %104 : vector<8x128xf32>
    %107 = arith.divf %105, %106 : vector<8x128xf32>
    %108 = vector.extract_strided_slice %101 {offsets = [0, 128], sizes = [8, 128], strides = [1, 1]} : vector<8x512xf32> to vector<8x128xf32>
    %109 = arith.negf %108 : vector<8x128xf32>
    %110 = math.exp %109 : vector<8x128xf32>
    %cst_28 = arith.constant 1.000000e+00 : f32
    %111 = vector.broadcast %cst_28 : f32 to vector<8x128xf32>
    %112 = arith.addf %111, %110 : vector<8x128xf32>
    %113 = arith.divf %111, %112 : vector<8x128xf32>
    %114 = vector.extract_strided_slice %101 {offsets = [0, 256], sizes = [8, 128], strides = [1, 1]} : vector<8x512xf32> to vector<8x128xf32>
    %115 = math.tanh %114 : vector<8x128xf32>
    %116 = vector.extract_strided_slice %101 {offsets = [0, 384], sizes = [8, 128], strides = [1, 1]} : vector<8x512xf32> to vector<8x128xf32>
    %117 = arith.negf %116 : vector<8x128xf32>
    %118 = math.exp %117 : vector<8x128xf32>
    %cst_29 = arith.constant 1.000000e+00 : f32
    %119 = vector.broadcast %cst_29 : f32 to vector<8x128xf32>
    %120 = arith.addf %119, %118 : vector<8x128xf32>
    %121 = arith.divf %119, %120 : vector<8x128xf32>
    %122 = arith.mulf %113, %93 : vector<8x128xf32>
    %123 = arith.mulf %107, %115 : vector<8x128xf32>
    %124 = arith.addf %122, %123 : vector<8x128xf32>
    %125 = math.tanh %124 : vector<8x128xf32>
    %126 = arith.mulf %121, %125 : vector<8x128xf32>
    %127 = arith.index_cast %c3_i32 : i32 to index
    %c0_30 = arith.constant 0 : index
    %c0_31 = arith.constant 0 : index
    %128 = vector.load %arg8[%127, %c0_30, %c0_31] : memref<8x8x128xf32, #tpu.memory_space<vmem>>, vector<1x8x128xf32>
    %129 = vector.shape_cast %128 : vector<1x8x128xf32> to vector<8x128xf32>
    %130 = vector.shape_cast %126 : vector<8x128xf32> to vector<1x8x128xf32>
    tpu.vector_store %arg8[%127, %c0_30, %c0_31], %130 {strides = array<i32>} : memref<8x8x128xf32, #tpu.memory_space<vmem>>, vector<1x8x128xf32>,
    %c4_i32 = arith.constant 4 : i32
    %cst_32 = arith.constant dense<0.000000e+00> : vector<8x512xf32>
    %131 = tpu.matmul %126, %4, %cst_32 {dimension_numbers = #tpu.dot_dimension_numbers<[1], [0], [0], [1], [0, 0, 1, 1], [], []>} : vector<8x128xf32>, vector<128x512xf32>, vector<8x512xf32> -> vector<8x512xf32>
    %132 = arith.addf %3, %131 : vector<8x512xf32>
    %133 = vector.extract_strided_slice %132 {offsets = [0, 0], sizes = [8, 128], strides = [1, 1]} : vector<8x512xf32> to vector<8x128xf32>
    %134 = arith.negf %133 : vector<8x128xf32>
    %135 = math.exp %134 : vector<8x128xf32>
    %cst_33 = arith.constant 1.000000e+00 : f32
    %136 = vector.broadcast %cst_33 : f32 to vector<8x128xf32>
    %137 = arith.addf %136, %135 : vector<8x128xf32>
    %138 = arith.divf %136, %137 : vector<8x128xf32>
    %139 = vector.extract_strided_slice %132 {offsets = [0, 128], sizes = [8, 128], strides = [1, 1]} : vector<8x512xf32> to vector<8x128xf32>
    %140 = arith.negf %139 : vector<8x128xf32>
    %141 = math.exp %140 : vector<8x128xf32>
    %cst_34 = arith.constant 1.000000e+00 : f32
    %142 = vector.broadcast %cst_34 : f32 to vector<8x128xf32>
    %143 = arith.addf %142, %141 : vector<8x128xf32>
    %144 = arith.divf %142, %143 : vector<8x128xf32>
    %145 = vector.extract_strided_slice %132 {offsets = [0, 256], sizes = [8, 128], strides = [1, 1]} : vector<8x512xf32> to vector<8x128xf32>
    %146 = math.tanh %145 : vector<8x128xf32>
    %147 = vector.extract_strided_slice %132 {offsets = [0, 384], sizes = [8, 128], strides = [1, 1]} : vector<8x512xf32> to vector<8x128xf32>
    %148 = arith.negf %147 : vector<8x128xf32>
    %149 = math.exp %148 : vector<8x128xf32>
    %cst_35 = arith.constant 1.000000e+00 : f32
    %150 = vector.broadcast %cst_35 : f32 to vector<8x128xf32>
    %151 = arith.addf %150, %149 : vector<8x128xf32>
    %152 = arith.divf %150, %151 : vector<8x128xf32>
    %153 = arith.mulf %144, %124 : vector<8x128xf32>
    %154 = arith.mulf %138, %146 : vector<8x128xf32>
    %155 = arith.addf %153, %154 : vector<8x128xf32>
    %156 = math.tanh %155 : vector<8x128xf32>
    %157 = arith.mulf %152, %156 : vector<8x128xf32>
    %158 = arith.index_cast %c4_i32 : i32 to index
    %c0_36 = arith.constant 0 : index
    %c0_37 = arith.constant 0 : index
    %159 = vector.load %arg8[%158, %c0_36, %c0_37] : memref<8x8x128xf32, #tpu.memory_space<vmem>>, vector<1x8x128xf32>
    %160 = vector.shape_cast %159 : vector<1x8x128xf32> to vector<8x128xf32>
    %161 = vector.shape_cast %157 : vector<8x128xf32> to vector<1x8x128xf32>
    tpu.vector_store %arg8[%158, %c0_36, %c0_37], %161 {strides = array<i32>} : memref<8x8x128xf32, #tpu.memory_space<vmem>>, vector<1x8x128xf32>,
    %c5_i32 = arith.constant 5 : i32
    %cst_38 = arith.constant dense<0.000000e+00> : vector<8x512xf32>
    %162 = tpu.matmul %157, %4, %cst_38 {dimension_numbers = #tpu.dot_dimension_numbers<[1], [0], [0], [1], [0, 0, 1, 1], [], []>} : vector<8x128xf32>, vector<128x512xf32>, vector<8x512xf32> -> vector<8x512xf32>
    %163 = arith.addf %3, %162 : vector<8x512xf32>
    %164 = vector.extract_strided_slice %163 {offsets = [0, 0], sizes = [8, 128], strides = [1, 1]} : vector<8x512xf32> to vector<8x128xf32>
    %165 = arith.negf %164 : vector<8x128xf32>
    %166 = math.exp %165 : vector<8x128xf32>
    %cst_39 = arith.constant 1.000000e+00 : f32
    %167 = vector.broadcast %cst_39 : f32 to vector<8x128xf32>
    %168 = arith.addf %167, %166 : vector<8x128xf32>
    %169 = arith.divf %167, %168 : vector<8x128xf32>
    %170 = vector.extract_strided_slice %163 {offsets = [0, 128], sizes = [8, 128], strides = [1, 1]} : vector<8x512xf32> to vector<8x128xf32>
    %171 = arith.negf %170 : vector<8x128xf32>
    %172 = math.exp %171 : vector<8x128xf32>
    %cst_40 = arith.constant 1.000000e+00 : f32
    %173 = vector.broadcast %cst_40 : f32 to vector<8x128xf32>
    %174 = arith.addf %173, %172 : vector<8x128xf32>
    %175 = arith.divf %173, %174 : vector<8x128xf32>
    %176 = vector.extract_strided_slice %163 {offsets = [0, 256], sizes = [8, 128], strides = [1, 1]} : vector<8x512xf32> to vector<8x128xf32>
    %177 = math.tanh %176 : vector<8x128xf32>
    %178 = vector.extract_strided_slice %163 {offsets = [0, 384], sizes = [8, 128], strides = [1, 1]} : vector<8x512xf32> to vector<8x128xf32>
    %179 = arith.negf %178 : vector<8x128xf32>
    %180 = math.exp %179 : vector<8x128xf32>
    %cst_41 = arith.constant 1.000000e+00 : f32
    %181 = vector.broadcast %cst_41 : f32 to vector<8x128xf32>
    %182 = arith.addf %181, %180 : vector<8x128xf32>
    %183 = arith.divf %181, %182 : vector<8x128xf32>
    %184 = arith.mulf %175, %155 : vector<8x128xf32>
    %185 = arith.mulf %169, %177 : vector<8x128xf32>
    %186 = arith.addf %184, %185 : vector<8x128xf32>
    %187 = math.tanh %186 : vector<8x128xf32>
    %188 = arith.mulf %183, %187 : vector<8x128xf32>
    %189 = arith.index_cast %c5_i32 : i32 to index
    %c0_42 = arith.constant 0 : index
    %c0_43 = arith.constant 0 : index
    %190 = vector.load %arg8[%189, %c0_42, %c0_43] : memref<8x8x128xf32, #tpu.memory_space<vmem>>, vector<1x8x128xf32>
    %191 = vector.shape_cast %190 : vector<1x8x128xf32> to vector<8x128xf32>
    %192 = vector.shape_cast %188 : vector<8x128xf32> to vector<1x8x128xf32>
    tpu.vector_store %arg8[%189, %c0_42, %c0_43], %192 {strides = array<i32>} : memref<8x8x128xf32, #tpu.memory_space<vmem>>, vector<1x8x128xf32>,
    %c6_i32 = arith.constant 6 : i32
    %cst_44 = arith.constant dense<0.000000e+00> : vector<8x512xf32>
    %193 = tpu.matmul %188, %4, %cst_44 {dimension_numbers = #tpu.dot_dimension_numbers<[1], [0], [0], [1], [0, 0, 1, 1], [], []>} : vector<8x128xf32>, vector<128x512xf32>, vector<8x512xf32> -> vector<8x512xf32>
    %194 = arith.addf %3, %193 : vector<8x512xf32>
    %195 = vector.extract_strided_slice %194 {offsets = [0, 0], sizes = [8, 128], strides = [1, 1]} : vector<8x512xf32> to vector<8x128xf32>
    %196 = arith.negf %195 : vector<8x128xf32>
    %197 = math.exp %196 : vector<8x128xf32>
    %cst_45 = arith.constant 1.000000e+00 : f32
    %198 = vector.broadcast %cst_45 : f32 to vector<8x128xf32>
    %199 = arith.addf %198, %197 : vector<8x128xf32>
    %200 = arith.divf %198, %199 : vector<8x128xf32>
    %201 = vector.extract_strided_slice %194 {offsets = [0, 128], sizes = [8, 128], strides = [1, 1]} : vector<8x512xf32> to vector<8x128xf32>
    %202 = arith.negf %201 : vector<8x128xf32>
    %203 = math.exp %202 : vector<8x128xf32>
    %cst_46 = arith.constant 1.000000e+00 : f32
    %204 = vector.broadcast %cst_46 : f32 to vector<8x128xf32>
    %205 = arith.addf %204, %203 : vector<8x128xf32>
    %206 = arith.divf %204, %205 : vector<8x128xf32>
    %207 = vector.extract_strided_slice %194 {offsets = [0, 256], sizes = [8, 128], strides = [1, 1]} : vector<8x512xf32> to vector<8x128xf32>
    %208 = math.tanh %207 : vector<8x128xf32>
    %209 = vector.extract_strided_slice %194 {offsets = [0, 384], sizes = [8, 128], strides = [1, 1]} : vector<8x512xf32> to vector<8x128xf32>
    %210 = arith.negf %209 : vector<8x128xf32>
    %211 = math.exp %210 : vector<8x128xf32>
    %cst_47 = arith.constant 1.000000e+00 : f32
    %212 = vector.broadcast %cst_47 : f32 to vector<8x128xf32>
    %213 = arith.addf %212, %211 : vector<8x128xf32>
    %214 = arith.divf %212, %213 : vector<8x128xf32>
    %215 = arith.mulf %206, %186 : vector<8x128xf32>
    %216 = arith.mulf %200, %208 : vector<8x128xf32>
    %217 = arith.addf %215, %216 : vector<8x128xf32>
    %218 = math.tanh %217 : vector<8x128xf32>
    %219 = arith.mulf %214, %218 : vector<8x128xf32>
    %220 = arith.index_cast %c6_i32 : i32 to index
    %c0_48 = arith.constant 0 : index
    %c0_49 = arith.constant 0 : index
    %221 = vector.load %arg8[%220, %c0_48, %c0_49] : memref<8x8x128xf32, #tpu.memory_space<vmem>>, vector<1x8x128xf32>
    %222 = vector.shape_cast %221 : vector<1x8x128xf32> to vector<8x128xf32>
    %223 = vector.shape_cast %219 : vector<8x128xf32> to vector<1x8x128xf32>
    tpu.vector_store %arg8[%220, %c0_48, %c0_49], %223 {strides = array<i32>} : memref<8x8x128xf32, #tpu.memory_space<vmem>>, vector<1x8x128xf32>,
    %c7_i32 = arith.constant 7 : i32
    %cst_50 = arith.constant dense<0.000000e+00> : vector<8x512xf32>
    %224 = tpu.matmul %219, %4, %cst_50 {dimension_numbers = #tpu.dot_dimension_numbers<[1], [0], [0], [1], [0, 0, 1, 1], [], []>} : vector<8x128xf32>, vector<128x512xf32>, vector<8x512xf32> -> vector<8x512xf32>
    %225 = arith.addf %3, %224 : vector<8x512xf32>
    %226 = vector.extract_strided_slice %225 {offsets = [0, 0], sizes = [8, 128], strides = [1, 1]} : vector<8x512xf32> to vector<8x128xf32>
    %227 = arith.negf %226 : vector<8x128xf32>
    %228 = math.exp %227 : vector<8x128xf32>
    %cst_51 = arith.constant 1.000000e+00 : f32
    %229 = vector.broadcast %cst_51 : f32 to vector<8x128xf32>
    %230 = arith.addf %229, %228 : vector<8x128xf32>
    %231 = arith.divf %229, %230 : vector<8x128xf32>
    %232 = vector.extract_strided_slice %225 {offsets = [0, 128], sizes = [8, 128], strides = [1, 1]} : vector<8x512xf32> to vector<8x128xf32>
    %233 = arith.negf %232 : vector<8x128xf32>
    %234 = math.exp %233 : vector<8x128xf32>
    %cst_52 = arith.constant 1.000000e+00 : f32
    %235 = vector.broadcast %cst_52 : f32 to vector<8x128xf32>
    %236 = arith.addf %235, %234 : vector<8x128xf32>
    %237 = arith.divf %235, %236 : vector<8x128xf32>
    %238 = vector.extract_strided_slice %225 {offsets = [0, 256], sizes = [8, 128], strides = [1, 1]} : vector<8x512xf32> to vector<8x128xf32>
    %239 = math.tanh %238 : vector<8x128xf32>
    %240 = vector.extract_strided_slice %225 {offsets = [0, 384], sizes = [8, 128], strides = [1, 1]} : vector<8x512xf32> to vector<8x128xf32>
    %241 = arith.negf %240 : vector<8x128xf32>
    %242 = math.exp %241 : vector<8x128xf32>
    %cst_53 = arith.constant 1.000000e+00 : f32
    %243 = vector.broadcast %cst_53 : f32 to vector<8x128xf32>
    %244 = arith.addf %243, %242 : vector<8x128xf32>
    %245 = arith.divf %243, %244 : vector<8x128xf32>
    %246 = arith.mulf %237, %217 : vector<8x128xf32>
    %247 = arith.mulf %231, %239 : vector<8x128xf32>
    %248 = arith.addf %246, %247 : vector<8x128xf32>
    %249 = math.tanh %248 : vector<8x128xf32>
    %250 = arith.mulf %245, %249 : vector<8x128xf32>
    %251 = arith.index_cast %c7_i32 : i32 to index
    %c0_54 = arith.constant 0 : index
    %c0_55 = arith.constant 0 : index
    %252 = vector.load %arg8[%251, %c0_54, %c0_55] : memref<8x8x128xf32, #tpu.memory_space<vmem>>, vector<1x8x128xf32>
    %253 = vector.shape_cast %252 : vector<1x8x128xf32> to vector<8x128xf32>
    %254 = vector.shape_cast %250 : vector<8x128xf32> to vector<1x8x128xf32>
    tpu.vector_store %arg8[%251, %c0_54, %c0_55], %254 {strides = array<i32>} : memref<8x8x128xf32, #tpu.memory_space<vmem>>, vector<1x8x128xf32>,
    %c8_i32 = arith.constant 8 : i32
    %c0_56 = arith.constant 0 : index
    %c0_57 = arith.constant 0 : index
    %255 = vector.load %arg6[%c0_56, %c0_57] : memref<8x128xf32, #tpu.memory_space<vmem>>, vector<8x128xf32>
    tpu.vector_store %arg6[%c0_56, %c0_57], %250 {strides = array<i32>} : memref<8x128xf32, #tpu.memory_space<vmem>>, vector<8x128xf32>,
    %c0_58 = arith.constant 0 : index
    %c0_59 = arith.constant 0 : index
    %256 = vector.load %arg7[%c0_58, %c0_59] : memref<8x128xf32, #tpu.memory_space<vmem>>, vector<8x128xf32>
    tpu.vector_store %arg7[%c0_58, %c0_59], %248 {strides = array<i32>} : memref<8x128xf32, #tpu.memory_space<vmem>>, vector<8x128xf32>,
    %c0_60 = arith.constant 0 : index
    %c0_61 = arith.constant 0 : index
    %c0_62 = arith.constant 0 : index
    %257 = vector.load %arg8[%c0_60, %c0_61, %c0_62] : memref<8x8x128xf32, #tpu.memory_space<vmem>>, vector<8x8x128xf32>
    %258 = vector.shape_cast %257 : vector<8x8x128xf32> to vector<64x128xf32>
    %c0_63 = arith.constant 0 : index
    %c0_64 = arith.constant 0 : index
    %259 = vector.load %arg3[%c0_63, %c0_64] : memref<128x256xf32, #tpu.memory_space<vmem>>, vector<128x256xf32>
    %cst_65 = arith.constant dense<0.000000e+00> : vector<64x256xf32>
    %260 = tpu.matmul %258, %259, %cst_65 {dimension_numbers = #tpu.dot_dimension_numbers<[1], [0], [0], [1], [0, 0, 1, 1], [], []>} : vector<64x128xf32>, vector<128x256xf32>, vector<64x256xf32> -> vector<64x256xf32>
    %c0_66 = arith.constant 0 : index
    %c0_67 = arith.constant 0 : index
    %261 = vector.load %arg4[%c0_66, %c0_67] : memref<1x256xf32, #tpu.memory_space<vmem>>, vector<1x256xf32>
    %262 = vector.broadcast %261 : vector<1x256xf32> to vector<64x256xf32>
    %263 = arith.addf %260, %262 : vector<64x256xf32>
    %264 = vector.shape_cast %263 : vector<64x256xf32> to vector<8x8x256xf32>
    %265 = tpu.transpose %264, [1, 0, 2] : vector<8x8x256xf32> -> vector<8x8x256xf32>
    %c0_68 = arith.constant 0 : index
    %c0_69 = arith.constant 0 : index
    %c0_70 = arith.constant 0 : index
    %266 = vector.load %arg5[%c0_68, %c0_69, %c0_70] : memref<8x8x256xf32, #tpu.memory_space<vmem>>, vector<8x8x256xf32>
    tpu.vector_store %arg5[%c0_68, %c0_69, %c0_70], %265 {strides = array<i32>} : memref<8x8x256xf32, #tpu.memory_space<vmem>>, vector<8x8x256xf32>,
    return
  }
  func.func @transform_0(%arg0: i32) -> (i32, i32) {
    %c0_i32 = arith.constant 0 : i32
    %c0_i32_0 = arith.constant 0 : i32
    %c0_i32_1 = arith.constant 0 : i32
    return %c0_i32, %c0_i32_0 : i32, i32
  }
  func.func @transform_1(%arg0: i32) -> (i32, i32) {
    %c0_i32 = arith.constant 0 : i32
    %c0_i32_0 = arith.constant 0 : i32
    %c0_i32_1 = arith.constant 0 : i32
    return %c0_i32, %c0_i32_0 : i32, i32
  }
  func.func @transform_2(%arg0: i32) -> (i32, i32) {
    %c0_i32 = arith.constant 0 : i32
    %c0_i32_0 = arith.constant 0 : i32
    %c0_i32_1 = arith.constant 0 : i32
    return %c0_i32, %c0_i32_0 : i32, i32
  }
  func.func @transform_3(%arg0: i32) -> (i32, i32) {
    %c0_i32 = arith.constant 0 : i32
    %c0_i32_0 = arith.constant 0 : i32
    %c0_i32_1 = arith.constant 0 : i32
    return %c0_i32, %c0_i32_0 : i32, i32
  }
  func.func @transform_4(%arg0: i32) -> (i32, i32, i32) {
    %c0_i32 = arith.constant 0 : i32
    %c0_i32_0 = arith.constant 0 : i32
    %c0_i32_1 = arith.constant 0 : i32
    return %c0_i32, %arg0, %c0_i32_0 : i32, i32, i32
  }
}

</mosaic_0001>

<llo_original>
// kernel: tpu_custom_call.1
$region0: #{tpu_custom_call.1}
  #allocation0 [shape = 'u32[]', space=smem, size = 0x4, offset = 0x4, fixed_abs, tag = 'smem constant byte address 0x4 - core index']
  #allocation1 [shape = 'u32[144,128]{1,0:T(1,128)}', space=vmem, size = 0x12000, scoped, tag = 'internal scratch']
  #allocation2 [shape = 'f32[8,128]{1,0:T(8,128)}', space=vmem, size = 0x1000, scoped, tag = 'scratch operand']
  #allocation3 [shape = 'f32[8,128]{1,0:T(8,128)}', space=vmem, size = 0x1000, scoped, tag = 'scratch operand']
  #allocation4 [shape = 'f32[8,8,128]{2,1,0:T(8,128)}', space=vmem, size = 0x8000, scoped, tag = 'scratch operand']
  %s0 = inlined_call_operand.hbm [shape: f32[8,512], index: 0, kind: input, shape index: {}]
  %s1 = inlined_call_operand.hbm [shape: f32[128,512], index: 1, kind: input, shape index: {}]
  %s2 = inlined_call_operand.hbm [shape: f32[128,256], index: 2, kind: input, shape index: {}]
  %s3 = inlined_call_operand.vmem [shape: f32[1,256], index: 3, kind: input, shape index: {}]
  %s4 = inlined_call_operand.hbm [shape: f32[8,8,256], index: 4, kind: output, shape index: {}]
  %s5 = sld [smem:[#allocation0]]
  $region42: #{tpu_custom_call.1} parent=0
    _
  %s7 = ssub.s32 1, %s5
  %s8 = scalar_select 0, %s7, %s5
  $region1: #{tpu_custom_call.1} parent=0
    #allocation5 [shape = 'u8[16384]{0}', space=vmem, size = 0x4000, scoped, tag = 'input window, operand 0, single buffered']
    #allocation6 [shape = 's32[1]{0}', space=sflag, size = 0x4, scoped, tag = 'scoped memory for tpu_custom_call.1']
    #allocation7 [shape = 's32[1]{0}', space=sflag, size = 0x4, scoped, tag = 'scoped memory for tpu_custom_call.1']
    #allocation8 [shape = 'u8[262144]{0}', space=vmem, size = 0x40000, scoped, tag = 'input window, operand 1, single buffered']
    #allocation9 [shape = 's32[1]{0}', space=sflag, size = 0x4, scoped, tag = 'scoped memory for tpu_custom_call.1']
    #allocation10 [shape = 'u8[131072]{0}', space=vmem, size = 0x20000, scoped, tag = 'input window, operand 2, single buffered']
    #allocation11 [shape = 'u8[65536]{0}', space=vmem, size = 0x10000, scoped, tag = 'output window, operand 0, single buffered']
    %9 = vsyncpa [#allocation6], 0
    %10 = vsyncpa [#allocation9], 0
    %11 = vsyncpa [#allocation7], 0
    // Predicated region
    $region2: #{tpu_custom_call.1} parent=1 // pred_check
      _
    $region3: #{tpu_custom_call.1} parent=1 // pred_check_branch
      %13 = sbr.rel (0) target = $region5
    $region4: #{tpu_custom_call.1} parent=1 // pred_region
      %s15 = ssub.s32 512, 512
      %16 = vsyncadd [#allocation6], %s15
      %s18 = sshll.u32 [#allocation5], 4
      %s19 = int_to_ptr.vmem [resolvable:$true] %s18
      %21 = dma.hbm_to_vmem [thread:$0]  %s0, 512, %s19, [#allocation6]
    $region5: #{tpu_custom_call.1} parent=1 // pred_fallthru
      _
    // Predicated region
    $region6: #{tpu_custom_call.1} parent=1 // pred_check
      _
    $region7: #{tpu_custom_call.1} parent=1 // pred_check_branch
      %23 = sbr.rel (0) target = $region9
    $region8: #{tpu_custom_call.1} parent=1 // pred_region
      %s25 = ssub.s32 8192, 8192
      %26 = vsyncadd [#allocation9], %s25
      %s27 = sshll.u32 [#allocation8], 4
      %s28 = int_to_ptr.vmem [resolvable:$true] %s27
      %33 = dma.hbm_to_vmem [thread:$0]  %s1, 8192, %s28, [#allocation9], 512, 512, 32
    $region9: #{tpu_custom_call.1} parent=1 // pred_fallthru
      _
    // Predicated region
    $region10: #{tpu_custom_call.1} parent=1 // pred_check
      _
    $region11: #{tpu_custom_call.1} parent=1 // pred_check_branch
      %35 = sbr.rel (0) target = $region13
    $region12: #{tpu_custom_call.1} parent=1 // pred_region
      %s37 = ssub.s32 4096, 4096
      %38 = vsyncadd [#allocation9], %s37
      %s39 = sshll.u32 [#allocation10], 4
      %s40 = int_to_ptr.vmem [resolvable:$true] %s39
      %45 = dma.hbm_to_vmem [thread:$0]  %s2, 4096, %s40, [#allocation9], 256, 256, 16
    $region13: #{tpu_custom_call.1} parent=1 // pred_fallthru
      _
    // Predicated region
    $region14: #{tpu_custom_call.1} parent=1 // pred_check
      _
    $region15: #{tpu_custom_call.1} parent=1 // pred_check_branch
      %47 = sbr.rel (0) target = $region17
    $region16: #{tpu_custom_call.1} parent=1 // pred_region
      _
    $region17: #{tpu_custom_call.1} parent=1 // pred_fallthru
      _
    // Predicated region
    $region18: #{tpu_custom_call.1} parent=1 // pred_check
      _
    $region19: #{tpu_custom_call.1} parent=1 // pred_check_branch
      %49 = sbr.rel (0) target = $region21
    $region20: #{tpu_custom_call.1} parent=1 // pred_region
      %50 = dma.done [#allocation6], 512
    $region21: #{tpu_custom_call.1} parent=1 // pred_fallthru
      _
    // Predicated region
    $region22: #{tpu_custom_call.1} parent=1 // pred_check
      _
    $region23: #{tpu_custom_call.1} parent=1 // pred_check_branch
      %52 = sbr.rel (0) target = $region25
    $region24: #{tpu_custom_call.1} parent=1 // pred_region
      %53 = dma.done [#allocation9], 8192
    $region25: #{tpu_custom_call.1} parent=1 // pred_fallthru
      _
    // Predicated region
    $region26: #{tpu_custom_call.1} parent=1 // pred_check
      _
    $region27: #{tpu_custom_call.1} parent=1 // pred_check_branch
      %55 = sbr.rel (0) target = $region29
    $region28: #{tpu_custom_call.1} parent=1 // pred_region
      %56 = dma.done [#allocation9], 4096
    $region29: #{tpu_custom_call.1} parent=1 // pred_fallthru
      _
    %p57 = scmp.eq.s32.totalorder 0, 0
    // Predicated region
    $region30: #{tpu_custom_call.1} parent=1 // pred_check
      %p58 = pneg %p57
    $region31: #{tpu_custom_call.1} parent=1 // pred_check_branch
      %60 = sbr.rel (%p58) target = $region33
    $region32: #{tpu_custom_call.1} parent=1 // pred_region
      %61 = vst [vmem:[#allocation2] sm:$0xff] 0.0
      %62 = vst [vmem:[#allocation3] sm:$0xff] 0.0
    $region33: #{tpu_custom_call.1} parent=1 // pred_fallthru
      _
    %v63 = vld [vmem:[#allocation5] sm:$0xff]
    %v64 = vld [vmem:[#allocation5 + $0x8] sm:$0xff]
    %v65 = vld [vmem:[#allocation5 + $0x10] sm:$0xff]
    %v66 = vld [vmem:[#allocation5 + $0x18] sm:$0xff]
    %v67 = vld [vmem:[#allocation8] sm:$0xff]
    %v68 = vld [vmem:[#allocation8 + $0x8] sm:$0xff]
    %v69 = vld [vmem:[#allocation8 + $0x10] sm:$0xff]
    %v70 = vld [vmem:[#allocation8 + $0x18] sm:$0xff]
    %v71 = vld [vmem:[#allocation8 + $0x20] sm:$0xff]
    %v72 = vld [vmem:[#allocation8 + $0x28] sm:$0xff]
    %v73 = vld [vmem:[#allocation8 + $0x30] sm:$0xff]
    %v74 = vld [vmem:[#allocation8 + $0x38] sm:$0xff]
    %v75 = vld [vmem:[#allocation8 + $0x40] sm:$0xff]
    %v76 = vld [vmem:[#allocation8 + $0x48] sm:$0xff]
    %v77 = vld [vmem:[#allocation8 + $0x50] sm:$0xff]
    %v78 = vld [vmem:[#allocation8 + $0x58] sm:$0xff]
    %v79 = vld [vmem:[#allocation8 + $0x60] sm:$0xff]
    %v80 = vld [vmem:[#allocation8 + $0x68] sm:$0xff]
    %v81 = vld [vmem:[#allocation8 + $0x70] sm:$0xff]
    %v82 = vld [vmem:[#allocation8 + $0x78] sm:$0xff]
    %v83 = vld [vmem:[#allocation8 + $0x80] sm:$0xff]
    %v84 = vld [vmem:[#allocation8 + $0x88] sm:$0xff]
    %v85 = vld [vmem:[#allocation8 + $0x90] sm:$0xff]
    %v86 = vld [vmem:[#allocation8 + $0x98] sm:$0xff]
    %v87 = vld [vmem:[#allocation8 + $0xa0] sm:$0xff]
    %v88 = vld [vmem:[#allocation8 + $0xa8] sm:$0xff]
    %v89 = vld [vmem:[#allocation8 + $0xb0] sm:$0xff]
    %v90 = vld [vmem:[#allocation8 + $0xb8] sm:$0xff]
    %v91 = vld [vmem:[#allocation8 + $0xc0] sm:$0xff]
    %v92 = vld [vmem:[#allocation8 + $0xc8] sm:$0xff]
    %v93 = vld [vmem:[#allocation8 + $0xd0] sm:$0xff]
    %v94 = vld [vmem:[#allocation8 + $0xd8] sm:$0xff]
    %v95 = vld [vmem:[#allocation8 + $0xe0] sm:$0xff]
    %v96 = vld [vmem:[#allocation8 + $0xe8] sm:$0xff]
    %v97 = vld [vmem:[#allocation8 + $0xf0] sm:$0xff]
    %v98 = vld [vmem:[#allocation8 + $0xf8] sm:$0xff]
    %v99 = vld [vmem:[#allocation8 + $0x100] sm:$0xff]
    %v100 = vld [vmem:[#allocation8 + $0x108] sm:$0xff]
    %v101 = vld [vmem:[#allocation8 + $0x110] sm:$0xff]
    %v102 = vld [vmem:[#allocation8 + $0x118] sm:$0xff]
    %v103 = vld [vmem:[#allocation8 + $0x120] sm:$0xff]
    %v104 = vld [vmem:[#allocation8 + $0x128] sm:$0xff]
    %v105 = vld [vmem:[#allocation8 + $0x130] sm:$0xff]
    %v106 = vld [vmem:[#allocation8 + $0x138] sm:$0xff]
    %v107 = vld [vmem:[#allocation8 + $0x140] sm:$0xff]
    %v108 = vld [vmem:[#allocation8 + $0x148] sm:$0xff]
    %v109 = vld [vmem:[#allocation8 + $0x150] sm:$0xff]
    %v110 = vld [vmem:[#allocation8 + $0x158] sm:$0xff]
    %v111 = vld [vmem:[#allocation8 + $0x160] sm:$0xff]
    %v112 = vld [vmem:[#allocation8 + $0x168] sm:$0xff]
    %v113 = vld [vmem:[#allocation8 + $0x170] sm:$0xff]
    %v114 = vld [vmem:[#allocation8 + $0x178] sm:$0xff]
    %v115 = vld [vmem:[#allocation8 + $0x180] sm:$0xff]
    %v116 = vld [vmem:[#allocation8 + $0x188] sm:$0xff]
    %v117 = vld [vmem:[#allocation8 + $0x190] sm:$0xff]
    %v118 = vld [vmem:[#allocation8 + $0x198] sm:$0xff]
    %v119 = vld [vmem:[#allocation8 + $0x1a0] sm:$0xff]
    %v120 = vld [vmem:[#allocation8 + $0x1a8] sm:$0xff]
    %v121 = vld [vmem:[#allocation8 + $0x1b0] sm:$0xff]
    %v122 = vld [vmem:[#allocation8 + $0x1b8] sm:$0xff]
    %v123 = vld [vmem:[#allocation8 + $0x1c0] sm:$0xff]
    %v124 = vld [vmem:[#allocation8 + $0x1c8] sm:$0xff]
    %v125 = vld [vmem:[#allocation8 + $0x1d0] sm:$0xff]
    %v126 = vld [vmem:[#allocation8 + $0x1d8] sm:$0xff]
    %v127 = vld [vmem:[#allocation8 + $0x1e0] sm:$0xff]
    %v128 = vld [vmem:[#allocation8 + $0x1e8] sm:$0xff]
    %v129 = vld [vmem:[#allocation8 + $0x1f0] sm:$0xff]
    %v130 = vld [vmem:[#allocation8 + $0x1f8] sm:$0xff]
    %v131 = vld [vmem:[#allocation2] sm:$0xff]
    %v132 = vld [vmem:[#allocation3] sm:$0xff]
    %133 = vmatprep.subr.mxu0 %v68
    %134 = vmatpush1.msra.mxu0 %v67
    %135 = vmatprep.subr.mxu0 %v72
    %136 = vmatpush1.msra.mxu0 %v71
    %137 = vmatprep.subr.mxu0 %v76
    %138 = vmatpush1.msra.mxu0 %v75
    %139 = vmatprep.subr.mxu0 %v80
    %140 = vmatpush1.msra.mxu0 %v79
    %141 = vmatprep.subr.mxu0 %v84
    %142 = vmatpush1.msra.mxu0 %v83
    %143 = vmatprep.subr.mxu0 %v88
    %144 = vmatpush1.msra.mxu0 %v87
    %145 = vmatprep.subr.mxu0 %v92
    %146 = vmatpush1.msra.mxu0 %v91
    %147 = vmatprep.subr.mxu0 %v96
    %148 = vmatpush1.msra.mxu0 %v95
    %149 = vmatprep.subr.mxu0 %v100
    %150 = vmatpush1.msra.mxu0 %v99
    %151 = vmatprep.subr.mxu0 %v104
    %152 = vmatpush1.msra.mxu0 %v103
    %153 = vmatprep.subr.mxu0 %v108
    %154 = vmatpush1.msra.mxu0 %v107
    %155 = vmatprep.subr.mxu0 %v112
    %156 = vmatpush1.msra.mxu0 %v111
    %157 = vmatprep.subr.mxu0 %v116
    %158 = vmatpush1.msra.mxu0 %v115
    %159 = vmatprep.subr.mxu0 %v120
    %160 = vmatpush1.msra.mxu0 %v119
    %161 = vmatprep.subr.mxu0 %v124
    %162 = vmatpush1.msra.mxu0 %v123
    %163 = vmatprep.subr.mxu0 %v128
    %164 = vmatpush1.msra.mxu0 %v127
    %165 = vmatprep.subr.mxu0 0.0
    %166 = vmatpush1.msra.mxu0 0.0
    %167 = vmatprep.subr.mxu0 0.0
    %168 = vmatpush1.msra.mxu0 0.0
    %169 = vmatprep.subr.mxu0 0.0
    %170 = vmatpush1.msra.mxu0 0.0
    %171 = vmatprep.subr.mxu0 0.0
    %172 = vmatpush1.msra.mxu0 0.0
    %173 = vmatprep.subr.mxu0 0.0
    %174 = vmatpush1.msra.mxu0 0.0
    %175 = vmatprep.subr.mxu0 0.0
    %176 = vmatpush1.msra.mxu0 0.0
    %177 = vmatprep.subr.mxu0 0.0
    %178 = vmatpush1.msra.mxu0 0.0
    %179 = vmatprep.subr.mxu0 0.0
    %180 = vmatpush1.msra.mxu0 0.0
    %181 = vmatprep.subr.mxu0 0.0
    %182 = vmatpush1.msra.mxu0 0.0
    %183 = vmatprep.subr.mxu0 0.0
    %184 = vmatpush1.msra.mxu0 0.0
    %185 = vmatprep.subr.mxu0 0.0
    %186 = vmatpush1.msra.mxu0 0.0
    %187 = vmatprep.subr.mxu0 0.0
    %188 = vmatpush1.msra.mxu0 0.0
    %189 = vmatprep.subr.mxu0 0.0
    %190 = vmatpush1.msra.mxu0 0.0
    %191 = vmatprep.subr.mxu0 0.0
    %192 = vmatpush1.msra.mxu0 0.0
    %193 = vmatprep.subr.mxu0 0.0
    %194 = vmatpush1.msra.mxu0 0.0
    %195 = vmatprep.subr.mxu0 0.0
    %196 = vmatpush1.msra.mxu0 0.0
    %197 = vmatprep.mubr.f32.mxu0 0.0
    %198 = vmatmul.mubr.f32.gmra.mrb[0].mxu0 %v131
    %v199 = vpop.f32.mrb[0].mxu0
    %v200 = vadd.f32 0.0, %v199
    %v201 = vpop.f32.mrb[0].mxu0
    %v202 = vadd.f32 0.0, %v201
    %203 = vdwg.mxu0
    %204 = vmatprep.subr.mxu0 %v70
    %205 = vmatpush1.msra.mxu0 %v69
    %206 = vmatprep.subr.mxu0 %v74
    %207 = vmatpush1.msra.mxu0 %v73
    %208 = vmatprep.subr.mxu0 %v78
    %209 = vmatpush1.msra.mxu0 %v77
    %210 = vmatprep.subr.mxu0 %v82
    %211 = vmatpush1.msra.mxu0 %v81
    %212 = vmatprep.subr.mxu0 %v86
    %213 = vmatpush1.msra.mxu0 %v85
    %214 = vmatprep.subr.mxu0 %v90
    %215 = vmatpush1.msra.mxu0 %v89
    %216 = vmatprep.subr.mxu0 %v94
    %217 = vmatpush1.msra.mxu0 %v93
    %218 = vmatprep.subr.mxu0 %v98
    %219 = vmatpush1.msra.mxu0 %v97
    %220 = vmatprep.subr.mxu0 %v102
    %221 = vmatpush1.msra.mxu0 %v101
    %222 = vmatprep.subr.mxu0 %v106
    %223 = vmatpush1.msra.mxu0 %v105
    %224 = vmatprep.subr.mxu0 %v110
    %225 = vmatpush1.msra.mxu0 %v109
    %226 = vmatprep.subr.mxu0 %v114
    %227 = vmatpush1.msra.mxu0 %v113
    %228 = vmatprep.subr.mxu0 %v118
    %229 = vmatpush1.msra.mxu0 %v117
    %230 = vmatprep.subr.mxu0 %v122
    %231 = vmatpush1.msra.mxu0 %v121
    %232 = vmatprep.subr.mxu0 %v126
    %233 = vmatpush1.msra.mxu0 %v125
    %234 = vmatprep.subr.mxu0 %v130
    %235 = vmatpush1.msra.mxu0 %v129
    %236 = vmatprep.subr.mxu0 0.0
    %237 = vmatpush1.msra.mxu0 0.0
    %238 = vmatprep.subr.mxu0 0.0
    %239 = vmatpush1.msra.mxu0 0.0
    %240 = vmatprep.subr.mxu0 0.0
    %241 = vmatpush1.msra.mxu0 0.0
    %242 = vmatprep.subr.mxu0 0.0
    %243 = vmatpush1.msra.mxu0 0.0
    %244 = vmatprep.subr.mxu0 0.0
    %245 = vmatpush1.msra.mxu0 0.0
    %246 = vmatprep.subr.mxu0 0.0
    %247 = vmatpush1.msra.mxu0 0.0
    %248 = vmatprep.subr.mxu0 0.0
    %249 = vmatpush1.msra.mxu0 0.0
    %250 = vmatprep.subr.mxu0 0.0
    %251 = vmatpush1.msra.mxu0 0.0
    %252 = vmatprep.subr.mxu0 0.0
    %253 = vmatpush1.msra.mxu0 0.0
    %254 = vmatprep.subr.mxu0 0.0
    %255 = vmatpush1.msra.mxu0 0.0
    %256 = vmatprep.subr.mxu0 0.0
    %257 = vmatpush1.msra.mxu0 0.0
    %258 = vmatprep.subr.mxu0 0.0
    %259 = vmatpush1.msra.mxu0 0.0
    %260 = vmatprep.subr.mxu0 0.0
    %261 = vmatpush1.msra.mxu0 0.0
    %262 = vmatprep.subr.mxu0 0.0
    %263 = vmatpush1.msra.mxu0 0.0
    %264 = vmatprep.subr.mxu0 0.0
    %265 = vmatpush1.msra.mxu0 0.0
    %266 = vmatprep.subr.mxu0 0.0
    %267 = vmatpush1.msra.mxu0 0.0
    %268 = vmatprep.mubr.f32.mxu0 0.0
    %269 = vmatmul.mubr.f32.gmra.mrb[0].mxu0 %v131
    %v270 = vpop.f32.mrb[0].mxu0
    %v271 = vadd.f32 0.0, %v270
    %v272 = vpop.f32.mrb[0].mxu0
    %v273 = vadd.f32 0.0, %v272
    %274 = vdwg.mxu0
    %v275 = vadd.f32 %v63, %v200
    %v276 = vadd.f32 %v64, %v202
    %v277 = vadd.f32 %v65, %v271
    %v278 = vadd.f32 %v66, %v273
    %v279 = vxor.u32 %v275, 2147483648
    %v280 = vmul.f32 %v279, 1.442695
    %v281 = vpow.pop %v280
    %v282 = vadd.f32 %v281, 1.0
    %v283 = vrcp.pop %v282
    %v284 = vmul.f32 1.0, %v283
    %v285 = vxor.u32 %v276, 2147483648
    %v286 = vmul.f32 %v285, 1.442695
    %v287 = vpow.pop %v286
    %v288 = vadd.f32 %v287, 1.0
    %v289 = vrcp.pop %v288
    %v290 = vmul.f32 1.0, %v289
    %v291 = vtanh.pop %v277
    %v292 = vxor.u32 %v278, 2147483648
    %v293 = vmul.f32 %v292, 1.442695
    %v294 = vpow.pop %v293
    %v295 = vadd.f32 %v294, 1.0
    %v296 = vrcp.pop %v295
    %v297 = vmul.f32 1.0, %v296
    %v298 = vmul.f32 %v290, %v132
    %v299 = vmul.f32 %v284, %v291
    %v300 = vadd.f32 %v298, %v299
    %v301 = vtanh.pop %v300
    %v302 = vmul.f32 %v297, %v301
    %303 = vst [vmem:[#allocation4] sm:$0xff] %v302
    %304 = vmatprep.subr.mxu0 %v68
    %305 = vmatpush1.msra.mxu0 %v67
    %306 = vmatprep.subr.mxu0 %v72
    %307 = vmatpush1.msra.mxu0 %v71
    %308 = vmatprep.subr.mxu0 %v76
    %309 = vmatpush1.msra.mxu0 %v75
    %310 = vmatprep.subr.mxu0 %v80
    %311 = vmatpush1.msra.mxu0 %v79
    %312 = vmatprep.subr.mxu0 %v84
    %313 = vmatpush1.msra.mxu0 %v83
    %314 = vmatprep.subr.mxu0 %v88
    %315 = vmatpush1.msra.mxu0 %v87
    %316 = vmatprep.subr.mxu0 %v92
    %317 = vmatpush1.msra.mxu0 %v91
    %318 = vmatprep.subr.mxu0 %v96
    %319 = vmatpush1.msra.mxu0 %v95
    %320 = vmatprep.subr.mxu0 %v100
    %321 = vmatpush1.msra.mxu0 %v99
    %322 = vmatprep.subr.mxu0 %v104
    %323 = vmatpush1.msra.mxu0 %v103
    %324 = vmatprep.subr.mxu0 %v108
    %325 = vmatpush1.msra.mxu0 %v107
    %326 = vmatprep.subr.mxu0 %v112
    %327 = vmatpush1.msra.mxu0 %v111
    %328 = vmatprep.subr.mxu0 %v116
    %329 = vmatpush1.msra.mxu0 %v115
    %330 = vmatprep.subr.mxu0 %v120
    %331 = vmatpush1.msra.mxu0 %v119
    %332 = vmatprep.subr.mxu0 %v124
    %333 = vmatpush1.msra.mxu0 %v123
    %334 = vmatprep.subr.mxu0 %v128
    %335 = vmatpush1.msra.mxu0 %v127
    %336 = vmatprep.subr.mxu0 0.0
    %337 = vmatpush1.msra.mxu0 0.0
    %338 = vmatprep.subr.mxu0 0.0
    %339 = vmatpush1.msra.mxu0 0.0
    %340 = vmatprep.subr.mxu0 0.0
    %341 = vmatpush1.msra.mxu0 0.0
    %342 = vmatprep.subr.mxu0 0.0
    %343 = vmatpush1.msra.mxu0 0.0
    %344 = vmatprep.subr.mxu0 0.0
    %345 = vmatpush1.msra.mxu0 0.0
    %346 = vmatprep.subr.mxu0 0.0
    %347 = vmatpush1.msra.mxu0 0.0
    %348 = vmatprep.subr.mxu0 0.0
    %349 = vmatpush1.msra.mxu0 0.0
    %350 = vmatprep.subr.mxu0 0.0
    %351 = vmatpush1.msra.mxu0 0.0
    %352 = vmatprep.subr.mxu0 0.0
    %353 = vmatpush1.msra.mxu0 0.0
    %354 = vmatprep.subr.mxu0 0.0
    %355 = vmatpush1.msra.mxu0 0.0
    %356 = vmatprep.subr.mxu0 0.0
    %357 = vmatpush1.msra.mxu0 0.0
    %358 = vmatprep.subr.mxu0 0.0
    %359 = vmatpush1.msra.mxu0 0.0
    %360 = vmatprep.subr.mxu0 0.0
    %361 = vmatpush1.msra.mxu0 0.0
    %362 = vmatprep.subr.mxu0 0.0
    %363 = vmatpush1.msra.mxu0 0.0
    %364 = vmatprep.subr.mxu0 0.0
    %365 = vmatpush1.msra.mxu0 0.0
    %366 = vmatprep.subr.mxu0 0.0
    %367 = vmatpush1.msra.mxu0 0.0
    %368 = vmatprep.mubr.f32.mxu0 0.0
    %369 = vmatmul.mubr.f32.gmra.mrb[0].mxu0 %v302
    %v370 = vpop.f32.mrb[0].mxu0
    %v371 = vadd.f32 0.0, %v370
    %v372 = vpop.f32.mrb[0].mxu0
    %v373 = vadd.f32 0.0, %v372
    %374 = vdwg.mxu0
    %375 = vmatprep.subr.mxu0 %v70
    %376 = vmatpush1.msra.mxu0 %v69
    %377 = vmatprep.subr.mxu0 %v74
    %378 = vmatpush1.msra.mxu0 %v73
    %379 = vmatprep.subr.mxu0 %v78
    %380 = vmatpush1.msra.mxu0 %v77
    %381 = vmatprep.subr.mxu0 %v82
    %382 = vmatpush1.msra.mxu0 %v81
    %383 = vmatprep.subr.mxu0 %v86
    %384 = vmatpush1.msra.mxu0 %v85
    %385 = vmatprep.subr.mxu0 %v90
    %386 = vmatpush1.msra.mxu0 %v89
    %387 = vmatprep.subr.mxu0 %v94
    %388 = vmatpush1.msra.mxu0 %v93
    %389 = vmatprep.subr.mxu0 %v98
    %390 = vmatpush1.msra.mxu0 %v97
    %391 = vmatprep.subr.mxu0 %v102
    %392 = vmatpush1.msra.mxu0 %v101
    %393 = vmatprep.subr.mxu0 %v106
    %394 = vmatpush1.msra.mxu0 %v105
    %395 = vmatprep.subr.mxu0 %v110
    %396 = vmatpush1.msra.mxu0 %v109
    %397 = vmatprep.subr.mxu0 %v114
    %398 = vmatpush1.msra.mxu0 %v113
    %399 = vmatprep.subr.mxu0 %v118
    %400 = vmatpush1.msra.mxu0 %v117
    %401 = vmatprep.subr.mxu0 %v122
    %402 = vmatpush1.msra.mxu0 %v121
    %403 = vmatprep.subr.mxu0 %v126
    %404 = vmatpush1.msra.mxu0 %v125
    %405 = vmatprep.subr.mxu0 %v130
    %406 = vmatpush1.msra.mxu0 %v129
    %407 = vmatprep.subr.mxu0 0.0
    %408 = vmatpush1.msra.mxu0 0.0
    %409 = vmatprep.subr.mxu0 0.0
    %410 = vmatpush1.msra.mxu0 0.0
    %411 = vmatprep.subr.mxu0 0.0
    %412 = vmatpush1.msra.mxu0 0.0
    %413 = vmatprep.subr.mxu0 0.0
    %414 = vmatpush1.msra.mxu0 0.0
    %415 = vmatprep.subr.mxu0 0.0
    %416 = vmatpush1.msra.mxu0 0.0
    %417 = vmatprep.subr.mxu0 0.0
    %418 = vmatpush1.msra.mxu0 0.0
    %419 = vmatprep.subr.mxu0 0.0
    %420 = vmatpush1.msra.mxu0 0.0
    %421 = vmatprep.subr.mxu0 0.0
    %422 = vmatpush1.msra.mxu0 0.0
    %423 = vmatprep.subr.mxu0 0.0
    %424 = vmatpush1.msra.mxu0 0.0
    %425 = vmatprep.subr.mxu0 0.0
    %426 = vmatpush1.msra.mxu0 0.0
    %427 = vmatprep.subr.mxu0 0.0
    %428 = vmatpush1.msra.mxu0 0.0
    %429 = vmatprep.subr.mxu0 0.0
    %430 = vmatpush1.msra.mxu0 0.0
    %431 = vmatprep.subr.mxu0 0.0
    %432 = vmatpush1.msra.mxu0 0.0
    %433 = vmatprep.subr.mxu0 0.0
    %434 = vmatpush1.msra.mxu0 0.0
    %435 = vmatprep.subr.mxu0 0.0
    %436 = vmatpush1.msra.mxu0 0.0
    %437 = vmatprep.subr.mxu0 0.0
    %438 = vmatpush1.msra.mxu0 0.0
    %439 = vmatprep.mubr.f32.mxu0 0.0
    %440 = vmatmul.mubr.f32.gmra.mrb[0].mxu0 %v302
    %v441 = vpop.f32.mrb[0].mxu0
    %v442 = vadd.f32 0.0, %v441
    %v443 = vpop.f32.mrb[0].mxu0
    %v444 = vadd.f32 0.0, %v443
    %445 = vdwg.mxu0
    %v446 = vadd.f32 %v63, %v371
    %v447 = vadd.f32 %v64, %v373
    %v448 = vadd.f32 %v65, %v442
    %v449 = vadd.f32 %v66, %v444
    %v450 = vxor.u32 %v446, 2147483648
    %v451 = vmul.f32 %v450, 1.442695
    %v452 = vpow.pop %v451
    %v453 = vadd.f32 %v452, 1.0
    %v454 = vrcp.pop %v453
    %v455 = vmul.f32 1.0, %v454
    %v456 = vxor.u32 %v447, 2147483648
    %v457 = vmul.f32 %v456, 1.442695
    %v458 = vpow.pop %v457
    %v459 = vadd.f32 %v458, 1.0
    %v460 = vrcp.pop %v459
    %v461 = vmul.f32 1.0, %v460
    %v462 = vtanh.pop %v448
    %v463 = vxor.u32 %v449, 2147483648
    %v464 = vmul.f32 %v463, 1.442695
    %v465 = vpow.pop %v464
    %v466 = vadd.f32 %v465, 1.0
    %v467 = vrcp.pop %v466
    %v468 = vmul.f32 1.0, %v467
    %v469 = vmul.f32 %v461, %v300
    %v470 = vmul.f32 %v455, %v462
    %v471 = vadd.f32 %v469, %v470
    %v472 = vtanh.pop %v471
    %v473 = vmul.f32 %v468, %v472
    %s474 = scalar_lea.vmem [#allocation4], 8
    %475 = vst [vmem:[%s474] sm:$0xff] %v473
    %476 = vmatprep.subr.mxu0 %v68
    %477 = vmatpush1.msra.mxu0 %v67
    %478 = vmatprep.subr.mxu0 %v72
    %479 = vmatpush1.msra.mxu0 %v71
    %480 = vmatprep.subr.mxu0 %v76
    %481 = vmatpush1.msra.mxu0 %v75
    %482 = vmatprep.subr.mxu0 %v80
    %483 = vmatpush1.msra.mxu0 %v79
    %484 = vmatprep.subr.mxu0 %v84
    %485 = vmatpush1.msra.mxu0 %v83
    %486 = vmatprep.subr.mxu0 %v88
    %487 = vmatpush1.msra.mxu0 %v87
    %488 = vmatprep.subr.mxu0 %v92
    %489 = vmatpush1.msra.mxu0 %v91
    %490 = vmatprep.subr.mxu0 %v96
    %491 = vmatpush1.msra.mxu0 %v95
    %492 = vmatprep.subr.mxu0 %v100
    %493 = vmatpush1.msra.mxu0 %v99
    %494 = vmatprep.subr.mxu0 %v104
    %495 = vmatpush1.msra.mxu0 %v103
    %496 = vmatprep.subr.mxu0 %v108
    %497 = vmatpush1.msra.mxu0 %v107
    %498 = vmatprep.subr.mxu0 %v112
    %499 = vmatpush1.msra.mxu0 %v111
    %500 = vmatprep.subr.mxu0 %v116
    %501 = vmatpush1.msra.mxu0 %v115
    %502 = vmatprep.subr.mxu0 %v120
    %503 = vmatpush1.msra.mxu0 %v119
    %504 = vmatprep.subr.mxu0 %v124
    %505 = vmatpush1.msra.mxu0 %v123
    %506 = vmatprep.subr.mxu0 %v128
    %507 = vmatpush1.msra.mxu0 %v127
    %508 = vmatprep.subr.mxu0 0.0
    %509 = vmatpush1.msra.mxu0 0.0
    %510 = vmatprep.subr.mxu0 0.0
    %511 = vmatpush1.msra.mxu0 0.0
    %512 = vmatprep.subr.mxu0 0.0
    %513 = vmatpush1.msra.mxu0 0.0
    %514 = vmatprep.subr.mxu0 0.0
    %515 = vmatpush1.msra.mxu0 0.0
    %516 = vmatprep.subr.mxu0 0.0
    %517 = vmatpush1.msra.mxu0 0.0
    %518 = vmatprep.subr.mxu0 0.0
    %519 = vmatpush1.msra.mxu0 0.0
    %520 = vmatprep.subr.mxu0 0.0
    %521 = vmatpush1.msra.mxu0 0.0
    %522 = vmatprep.subr.mxu0 0.0
    %523 = vmatpush1.msra.mxu0 0.0
    %524 = vmatprep.subr.mxu0 0.0
    %525 = vmatpush1.msra.mxu0 0.0
    %526 = vmatprep.subr.mxu0 0.0
    %527 = vmatpush1.msra.mxu0 0.0
    %528 = vmatprep.subr.mxu0 0.0
    %529 = vmatpush1.msra.mxu0 0.0
    %530 = vmatprep.subr.mxu0 0.0
    %531 = vmatpush1.msra.mxu0 0.0
    %532 = vmatprep.subr.mxu0 0.0
    %533 = vmatpush1.msra.mxu0 0.0
    %534 = vmatprep.subr.mxu0 0.0
    %535 = vmatpush1.msra.mxu0 0.0
    %536 = vmatprep.subr.mxu0 0.0
    %537 = vmatpush1.msra.mxu0 0.0
    %538 = vmatprep.subr.mxu0 0.0
    %539 = vmatpush1.msra.mxu0 0.0
    %540 = vmatprep.mubr.f32.mxu0 0.0
    %541 = vmatmul.mubr.f32.gmra.mrb[0].mxu0 %v473
    %v542 = vpop.f32.mrb[0].mxu0
    %v543 = vadd.f32 0.0, %v542
    %v544 = vpop.f32.mrb[0].mxu0
    %v545 = vadd.f32 0.0, %v544
    %546 = vdwg.mxu0
    %547 = vmatprep.subr.mxu0 %v70
    %548 = vmatpush1.msra.mxu0 %v69
    %549 = vmatprep.subr.mxu0 %v74
    %550 = vmatpush1.msra.mxu0 %v73
    %551 = vmatprep.subr.mxu0 %v78
    %552 = vmatpush1.msra.mxu0 %v77
    %553 = vmatprep.subr.mxu0 %v82
    %554 = vmatpush1.msra.mxu0 %v81
    %555 = vmatprep.subr.mxu0 %v86
    %556 = vmatpush1.msra.mxu0 %v85
    %557 = vmatprep.subr.mxu0 %v90
    %558 = vmatpush1.msra.mxu0 %v89
    %559 = vmatprep.subr.mxu0 %v94
    %560 = vmatpush1.msra.mxu0 %v93
    %561 = vmatprep.subr.mxu0 %v98
    %562 = vmatpush1.msra.mxu0 %v97
    %563 = vmatprep.subr.mxu0 %v102
    %564 = vmatpush1.msra.mxu0 %v101
    %565 = vmatprep.subr.mxu0 %v106
    %566 = vmatpush1.msra.mxu0 %v105
    %567 = vmatprep.subr.mxu0 %v110
    %568 = vmatpush1.msra.mxu0 %v109
    %569 = vmatprep.subr.mxu0 %v114
    %570 = vmatpush1.msra.mxu0 %v113
    %571 = vmatprep.subr.mxu0 %v118
    %572 = vmatpush1.msra.mxu0 %v117
    %573 = vmatprep.subr.mxu0 %v122
    %574 = vmatpush1.msra.mxu0 %v121
    %575 = vmatprep.subr.mxu0 %v126
    %576 = vmatpush1.msra.mxu0 %v125
    %577 = vmatprep.subr.mxu0 %v130
    %578 = vmatpush1.msra.mxu0 %v129
    %579 = vmatprep.subr.mxu0 0.0
    %580 = vmatpush1.msra.mxu0 0.0
    %581 = vmatprep.subr.mxu0 0.0
    %582 = vmatpush1.msra.mxu0 0.0
    %583 = vmatprep.subr.mxu0 0.0
    %584 = vmatpush1.msra.mxu0 0.0
    %585 = vmatprep.subr.mxu0 0.0
    %586 = vmatpush1.msra.mxu0 0.0
    %587 = vmatprep.subr.mxu0 0.0
    %588 = vmatpush1.msra.mxu0 0.0
    %589 = vmatprep.subr.mxu0 0.0
    %590 = vmatpush1.msra.mxu0 0.0
    %591 = vmatprep.subr.mxu0 0.0
    %592 = vmatpush1.msra.mxu0 0.0
    %593 = vmatprep.subr.mxu0 0.0
    %594 = vmatpush1.msra.mxu0 0.0
    %595 = vmatprep.subr.mxu0 0.0
    %596 = vmatpush1.msra.mxu0 0.0
    %597 = vmatprep.subr.mxu0 0.0
    %598 = vmatpush1.msra.mxu0 0.0
    %599 = vmatprep.subr.mxu0 0.0
    %600 = vmatpush1.msra.mxu0 0.0
    %601 = vmatprep.subr.mxu0 0.0
    %602 = vmatpush1.msra.mxu0 0.0
    %603 = vmatprep.subr.mxu0 0.0
    %604 = vmatpush1.msra.mxu0 0.0
    %605 = vmatprep.subr.mxu0 0.0
    %606 = vmatpush1.msra.mxu0 0.0
    %607 = vmatprep.subr.mxu0 0.0
    %608 = vmatpush1.msra.mxu0 0.0
    %609 = vmatprep.subr.mxu0 0.0
    %610 = vmatpush1.msra.mxu0 0.0
    %611 = vmatprep.mubr.f32.mxu0 0.0
    %612 = vmatmul.mubr.f32.gmra.mrb[0].mxu0 %v473
    %v613 = vpop.f32.mrb[0].mxu0
    %v614 = vadd.f32 0.0, %v613
    %v615 = vpop.f32.mrb[0].mxu0
    %v616 = vadd.f32 0.0, %v615
    %617 = vdwg.mxu0
    %v618 = vadd.f32 %v63, %v543
    %v619 = vadd.f32 %v64, %v545
    %v620 = vadd.f32 %v65, %v614
    %v621 = vadd.f32 %v66, %v616
    %v622 = vxor.u32 %v618, 2147483648
    %v623 = vmul.f32 %v622, 1.442695
    %v624 = vpow.pop %v623
    %v625 = vadd.f32 %v624, 1.0
    %v626 = vrcp.pop %v625
    %v627 = vmul.f32 1.0, %v626
    %v628 = vxor.u32 %v619, 2147483648
    %v629 = vmul.f32 %v628, 1.442695
    %v630 = vpow.pop %v629
    %v631 = vadd.f32 %v630, 1.0
    %v632 = vrcp.pop %v631
    %v633 = vmul.f32 1.0, %v632
    %v634 = vtanh.pop %v620
    %v635 = vxor.u32 %v621, 2147483648
    %v636 = vmul.f32 %v635, 1.442695
    %v637 = vpow.pop %v636
    %v638 = vadd.f32 %v637, 1.0
    %v639 = vrcp.pop %v638
    %v640 = vmul.f32 1.0, %v639
    %v641 = vmul.f32 %v633, %v471
    %v642 = vmul.f32 %v627, %v634
    %v643 = vadd.f32 %v641, %v642
    %v644 = vtanh.pop %v643
    %v645 = vmul.f32 %v640, %v644
    %s646 = scalar_lea.vmem [#allocation4], 16
    %647 = vst [vmem:[%s646] sm:$0xff] %v645
    %648 = vmatprep.subr.mxu0 %v68
    %649 = vmatpush1.msra.mxu0 %v67
    %650 = vmatprep.subr.mxu0 %v72
    %651 = vmatpush1.msra.mxu0 %v71
    %652 = vmatprep.subr.mxu0 %v76
    %653 = vmatpush1.msra.mxu0 %v75
    %654 = vmatprep.subr.mxu0 %v80
    %655 = vmatpush1.msra.mxu0 %v79
    %656 = vmatprep.subr.mxu0 %v84
    %657 = vmatpush1.msra.mxu0 %v83
    %658 = vmatprep.subr.mxu0 %v88
    %659 = vmatpush1.msra.mxu0 %v87
    %660 = vmatprep.subr.mxu0 %v92
    %661 = vmatpush1.msra.mxu0 %v91
    %662 = vmatprep.subr.mxu0 %v96
    %663 = vmatpush1.msra.mxu0 %v95
    %664 = vmatprep.subr.mxu0 %v100
    %665 = vmatpush1.msra.mxu0 %v99
    %666 = vmatprep.subr.mxu0 %v104
    %667 = vmatpush1.msra.mxu0 %v103
    %668 = vmatprep.subr.mxu0 %v108
    %669 = vmatpush1.msra.mxu0 %v107
    %670 = vmatprep.subr.mxu0 %v112
    %671 = vmatpush1.msra.mxu0 %v111
    %672 = vmatprep.subr.mxu0 %v116
    %673 = vmatpush1.msra.mxu0 %v115
    %674 = vmatprep.subr.mxu0 %v120
    %675 = vmatpush1.msra.mxu0 %v119
    %676 = vmatprep.subr.mxu0 %v124
    %677 = vmatpush1.msra.mxu0 %v123
    %678 = vmatprep.subr.mxu0 %v128
    %679 = vmatpush1.msra.mxu0 %v127
    %680 = vmatprep.subr.mxu0 0.0
    %681 = vmatpush1.msra.mxu0 0.0
    %682 = vmatprep.subr.mxu0 0.0
    %683 = vmatpush1.msra.mxu0 0.0
    %684 = vmatprep.subr.mxu0 0.0
    %685 = vmatpush1.msra.mxu0 0.0
    %686 = vmatprep.subr.mxu0 0.0
    %687 = vmatpush1.msra.mxu0 0.0
    %688 = vmatprep.subr.mxu0 0.0
    %689 = vmatpush1.msra.mxu0 0.0
    %690 = vmatprep.subr.mxu0 0.0
    %691 = vmatpush1.msra.mxu0 0.0
    %692 = vmatprep.subr.mxu0 0.0
    %693 = vmatpush1.msra.mxu0 0.0
    %694 = vmatprep.subr.mxu0 0.0
    %695 = vmatpush1.msra.mxu0 0.0
    %696 = vmatprep.subr.mxu0 0.0
    %697 = vmatpush1.msra.mxu0 0.0
    %698 = vmatprep.subr.mxu0 0.0
    %699 = vmatpush1.msra.mxu0 0.0
    %700 = vmatprep.subr.mxu0 0.0
    %701 = vmatpush1.msra.mxu0 0.0
    %702 = vmatprep.subr.mxu0 0.0
    %703 = vmatpush1.msra.mxu0 0.0
    %704 = vmatprep.subr.mxu0 0.0
    %705 = vmatpush1.msra.mxu0 0.0
    %706 = vmatprep.subr.mxu0 0.0
    %707 = vmatpush1.msra.mxu0 0.0
    %708 = vmatprep.subr.mxu0 0.0
    %709 = vmatpush1.msra.mxu0 0.0
    %710 = vmatprep.subr.mxu0 0.0
    %711 = vmatpush1.msra.mxu0 0.0
    %712 = vmatprep.mubr.f32.mxu0 0.0
    %713 = vmatmul.mubr.f32.gmra.mrb[0].mxu0 %v645
    %v714 = vpop.f32.mrb[0].mxu0
    %v715 = vadd.f32 0.0, %v714
    %v716 = vpop.f32.mrb[0].mxu0
    %v717 = vadd.f32 0.0, %v716
    %718 = vdwg.mxu0
    %719 = vmatprep.subr.mxu0 %v70
    %720 = vmatpush1.msra.mxu0 %v69
    %721 = vmatprep.subr.mxu0 %v74
    %722 = vmatpush1.msra.mxu0 %v73
    %723 = vmatprep.subr.mxu0 %v78
    %724 = vmatpush1.msra.mxu0 %v77
    %725 = vmatprep.subr.mxu0 %v82
    %726 = vmatpush1.msra.mxu0 %v81
    %727 = vmatprep.subr.mxu0 %v86
    %728 = vmatpush1.msra.mxu0 %v85
    %729 = vmatprep.subr.mxu0 %v90
    %730 = vmatpush1.msra.mxu0 %v89
    %731 = vmatprep.subr.mxu0 %v94
    %732 = vmatpush1.msra.mxu0 %v93
    %733 = vmatprep.subr.mxu0 %v98
    %734 = vmatpush1.msra.mxu0 %v97
    %735 = vmatprep.subr.mxu0 %v102
    %736 = vmatpush1.msra.mxu0 %v101
    %737 = vmatprep.subr.mxu0 %v106
    %738 = vmatpush1.msra.mxu0 %v105
    %739 = vmatprep.subr.mxu0 %v110
    %740 = vmatpush1.msra.mxu0 %v109
    %741 = vmatprep.subr.mxu0 %v114
    %742 = vmatpush1.msra.mxu0 %v113
    %743 = vmatprep.subr.mxu0 %v118
    %744 = vmatpush1.msra.mxu0 %v117
    %745 = vmatprep.subr.mxu0 %v122
    %746 = vmatpush1.msra.mxu0 %v121
    %747 = vmatprep.subr.mxu0 %v126
    %748 = vmatpush1.msra.mxu0 %v125
    %749 = vmatprep.subr.mxu0 %v130
    %750 = vmatpush1.msra.mxu0 %v129
    %751 = vmatprep.subr.mxu0 0.0
    %752 = vmatpush1.msra.mxu0 0.0
    %753 = vmatprep.subr.mxu0 0.0
    %754 = vmatpush1.msra.mxu0 0.0
    %755 = vmatprep.subr.mxu0 0.0
    %756 = vmatpush1.msra.mxu0 0.0
    %757 = vmatprep.subr.mxu0 0.0
    %758 = vmatpush1.msra.mxu0 0.0
    %759 = vmatprep.subr.mxu0 0.0
    %760 = vmatpush1.msra.mxu0 0.0
    %761 = vmatprep.subr.mxu0 0.0
    %762 = vmatpush1.msra.mxu0 0.0
    %763 = vmatprep.subr.mxu0 0.0
    %764 = vmatpush1.msra.mxu0 0.0
    %765 = vmatprep.subr.mxu0 0.0
    %766 = vmatpush1.msra.mxu0 0.0
    %767 = vmatprep.subr.mxu0 0.0
    %768 = vmatpush1.msra.mxu0 0.0
    %769 = vmatprep.subr.mxu0 0.0
    %770 = vmatpush1.msra.mxu0 0.0
    %771 = vmatprep.subr.mxu0 0.0
    %772 = vmatpush1.msra.mxu0 0.0
    %773 = vmatprep.subr.mxu0 0.0
    %774 = vmatpush1.msra.mxu0 0.0
    %775 = vmatprep.subr.mxu0 0.0
    %776 = vmatpush1.msra.mxu0 0.0
    %777 = vmatprep.subr.mxu0 0.0
    %778 = vmatpush1.msra.mxu0 0.0
    %779 = vmatprep.subr.mxu0 0.0
    %780 = vmatpush1.msra.mxu0 0.0
    %781 = vmatprep.subr.mxu0 0.0
    %782 = vmatpush1.msra.mxu0 0.0
    %783 = vmatprep.mubr.f32.mxu0 0.0
    %784 = vmatmul.mubr.f32.gmra.mrb[0].mxu0 %v645
    %v785 = vpop.f32.mrb[0].mxu0
    %v786 = vadd.f32 0.0, %v785
    %v787 = vpop.f32.mrb[0].mxu0
    %v788 = vadd.f32 0.0, %v787
    %789 = vdwg.mxu0
    %v790 = vadd.f32 %v63, %v715
    %v791 = vadd.f32 %v64, %v717
    %v792 = vadd.f32 %v65, %v786
    %v793 = vadd.f32 %v66, %v788
    %v794 = vxor.u32 %v790, 2147483648
    %v795 = vmul.f32 %v794, 1.442695
    %v796 = vpow.pop %v795
    %v797 = vadd.f32 %v796, 1.0
    %v798 = vrcp.pop %v797
    %v799 = vmul.f32 1.0, %v798
    %v800 = vxor.u32 %v791, 2147483648
    %v801 = vmul.f32 %v800, 1.442695
    %v802 = vpow.pop %v801
    %v803 = vadd.f32 %v802, 1.0
    %v804 = vrcp.pop %v803
    %v805 = vmul.f32 1.0, %v804
    %v806 = vtanh.pop %v792
    %v807 = vxor.u32 %v793, 2147483648
    %v808 = vmul.f32 %v807, 1.442695
    %v809 = vpow.pop %v808
    %v810 = vadd.f32 %v809, 1.0
    %v811 = vrcp.pop %v810
    %v812 = vmul.f32 1.0, %v811
    %v813 = vmul.f32 %v805, %v643
    %v814 = vmul.f32 %v799, %v806
    %v815 = vadd.f32 %v813, %v814
    %v816 = vtanh.pop %v815
    %v817 = vmul.f32 %v812, %v816
    %s818 = scalar_lea.vmem [#allocation4], 24
    %819 = vst [vmem:[%s818] sm:$0xff] %v817
    %820 = vmatprep.subr.mxu0 %v68
    %821 = vmatpush1.msra.mxu0 %v67
    %822 = vmatprep.subr.mxu0 %v72
    %823 = vmatpush1.msra.mxu0 %v71
    %824 = vmatprep.subr.mxu0 %v76
    %825 = vmatpush1.msra.mxu0 %v75
    %826 = vmatprep.subr.mxu0 %v80
    %827 = vmatpush1.msra.mxu0 %v79
    %828 = vmatprep.subr.mxu0 %v84
    %829 = vmatpush1.msra.mxu0 %v83
    %830 = vmatprep.subr.mxu0 %v88
    %831 = vmatpush1.msra.mxu0 %v87
    %832 = vmatprep.subr.mxu0 %v92
    %833 = vmatpush1.msra.mxu0 %v91
    %834 = vmatprep.subr.mxu0 %v96
    %835 = vmatpush1.msra.mxu0 %v95
    %836 = vmatprep.subr.mxu0 %v100
    %837 = vmatpush1.msra.mxu0 %v99
    %838 = vmatprep.subr.mxu0 %v104
    %839 = vmatpush1.msra.mxu0 %v103
    %840 = vmatprep.subr.mxu0 %v108
    %841 = vmatpush1.msra.mxu0 %v107
    %842 = vmatprep.subr.mxu0 %v112
    %843 = vmatpush1.msra.mxu0 %v111
    %844 = vmatprep.subr.mxu0 %v116
    %845 = vmatpush1.msra.mxu0 %v115
    %846 = vmatprep.subr.mxu0 %v120
    %847 = vmatpush1.msra.mxu0 %v119
    %848 = vmatprep.subr.mxu0 %v124
    %849 = vmatpush1.msra.mxu0 %v123
    %850 = vmatprep.subr.mxu0 %v128
    %851 = vmatpush1.msra.mxu0 %v127
    %852 = vmatprep.subr.mxu0 0.0
    %853 = vmatpush1.msra.mxu0 0.0
    %854 = vmatprep.subr.mxu0 0.0
    %855 = vmatpush1.msra.mxu0 0.0
    %856 = vmatprep.subr.mxu0 0.0
    %857 = vmatpush1.msra.mxu0 0.0
    %858 = vmatprep.subr.mxu0 0.0
    %859 = vmatpush1.msra.mxu0 0.0
    %860 = vmatprep.subr.mxu0 0.0
    %861 = vmatpush1.msra.mxu0 0.0
    %862 = vmatprep.subr.mxu0 0.0
    %863 = vmatpush1.msra.mxu0 0.0
    %864 = vmatprep.subr.mxu0 0.0
    %865 = vmatpush1.msra.mxu0 0.0
    %866 = vmatprep.subr.mxu0 0.0
    %867 = vmatpush1.msra.mxu0 0.0
    %868 = vmatprep.subr.mxu0 0.0
    %869 = vmatpush1.msra.mxu0 0.0
    %870 = vmatprep.subr.mxu0 0.0
    %871 = vmatpush1.msra.mxu0 0.0
    %872 = vmatprep.subr.mxu0 0.0
    %873 = vmatpush1.msra.mxu0 0.0
    %874 = vmatprep.subr.mxu0 0.0
    %875 = vmatpush1.msra.mxu0 0.0
    %876 = vmatprep.subr.mxu0 0.0
    %877 = vmatpush1.msra.mxu0 0.0
    %878 = vmatprep.subr.mxu0 0.0
    %879 = vmatpush1.msra.mxu0 0.0
    %880 = vmatprep.subr.mxu0 0.0
    %881 = vmatpush1.msra.mxu0 0.0
    %882 = vmatprep.subr.mxu0 0.0
    %883 = vmatpush1.msra.mxu0 0.0
    %884 = vmatprep.mubr.f32.mxu0 0.0
    %885 = vmatmul.mubr.f32.gmra.mrb[0].mxu0 %v817
    %v886 = vpop.f32.mrb[0].mxu0
    %v887 = vadd.f32 0.0, %v886
    %v888 = vpop.f32.mrb[0].mxu0
    %v889 = vadd.f32 0.0, %v888
    %890 = vdwg.mxu0
    %891 = vmatprep.subr.mxu0 %v70
    %892 = vmatpush1.msra.mxu0 %v69
    %893 = vmatprep.subr.mxu0 %v74
    %894 = vmatpush1.msra.mxu0 %v73
    %895 = vmatprep.subr.mxu0 %v78
    %896 = vmatpush1.msra.mxu0 %v77
    %897 = vmatprep.subr.mxu0 %v82
    %898 = vmatpush1.msra.mxu0 %v81
    %899 = vmatprep.subr.mxu0 %v86
    %900 = vmatpush1.msra.mxu0 %v85
    %901 = vmatprep.subr.mxu0 %v90
    %902 = vmatpush1.msra.mxu0 %v89
    %903 = vmatprep.subr.mxu0 %v94
    %904 = vmatpush1.msra.mxu0 %v93
    %905 = vmatprep.subr.mxu0 %v98
    %906 = vmatpush1.msra.mxu0 %v97
    %907 = vmatprep.subr.mxu0 %v102
    %908 = vmatpush1.msra.mxu0 %v101
    %909 = vmatprep.subr.mxu0 %v106
    %910 = vmatpush1.msra.mxu0 %v105
    %911 = vmatprep.subr.mxu0 %v110
    %912 = vmatpush1.msra.mxu0 %v109
    %913 = vmatprep.subr.mxu0 %v114
    %914 = vmatpush1.msra.mxu0 %v113
    %915 = vmatprep.subr.mxu0 %v118
    %916 = vmatpush1.msra.mxu0 %v117
    %917 = vmatprep.subr.mxu0 %v122
    %918 = vmatpush1.msra.mxu0 %v121
    %919 = vmatprep.subr.mxu0 %v126
    %920 = vmatpush1.msra.mxu0 %v125
    %921 = vmatprep.subr.mxu0 %v130
    %922 = vmatpush1.msra.mxu0 %v129
    %923 = vmatprep.subr.mxu0 0.0
    %924 = vmatpush1.msra.mxu0 0.0
    %925 = vmatprep.subr.mxu0 0.0
    %926 = vmatpush1.msra.mxu0 0.0
    %927 = vmatprep.subr.mxu0 0.0
    %928 = vmatpush1.msra.mxu0 0.0
    %929 = vmatprep.subr.mxu0 0.0
    %930 = vmatpush1.msra.mxu0 0.0
    %931 = vmatprep.subr.mxu0 0.0
    %932 = vmatpush1.msra.mxu0 0.0
    %933 = vmatprep.subr.mxu0 0.0
    %934 = vmatpush1.msra.mxu0 0.0
    %935 = vmatprep.subr.mxu0 0.0
    %936 = vmatpush1.msra.mxu0 0.0
    %937 = vmatprep.subr.mxu0 0.0
    %938 = vmatpush1.msra.mxu0 0.0
    %939 = vmatprep.subr.mxu0 0.0
    %940 = vmatpush1.msra.mxu0 0.0
    %941 = vmatprep.subr.mxu0 0.0
    %942 = vmatpush1.msra.mxu0 0.0
    %943 = vmatprep.subr.mxu0 0.0
    %944 = vmatpush1.msra.mxu0 0.0
    %945 = vmatprep.subr.mxu0 0.0
    %946 = vmatpush1.msra.mxu0 0.0
    %947 = vmatprep.subr.mxu0 0.0
    %948 = vmatpush1.msra.mxu0 0.0
    %949 = vmatprep.subr.mxu0 0.0
    %950 = vmatpush1.msra.mxu0 0.0
    %951 = vmatprep.subr.mxu0 0.0
    %952 = vmatpush1.msra.mxu0 0.0
    %953 = vmatprep.subr.mxu0 0.0
    %954 = vmatpush1.msra.mxu0 0.0
    %955 = vmatprep.mubr.f32.mxu0 0.0
    %956 = vmatmul.mubr.f32.gmra.mrb[0].mxu0 %v817
    %v957 = vpop.f32.mrb[0].mxu0
    %v958 = vadd.f32 0.0, %v957
    %v959 = vpop.f32.mrb[0].mxu0
    %v960 = vadd.f32 0.0, %v959
    %961 = vdwg.mxu0
    %v962 = vadd.f32 %v63, %v887
    %v963 = vadd.f32 %v64, %v889
    %v964 = vadd.f32 %v65, %v958
    %v965 = vadd.f32 %v66, %v960
    %v966 = vxor.u32 %v962, 2147483648
    %v967 = vmul.f32 %v966, 1.442695
    %v968 = vpow.pop %v967
    %v969 = vadd.f32 %v968, 1.0
    %v970 = vrcp.pop %v969
    %v971 = vmul.f32 1.0, %v970
    %v972 = vxor.u32 %v963, 2147483648
    %v973 = vmul.f32 %v972, 1.442695
    %v974 = vpow.pop %v973
    %v975 = vadd.f32 %v974, 1.0
    %v976 = vrcp.pop %v975
    %v977 = vmul.f32 1.0, %v976
    %v978 = vtanh.pop %v964
    %v979 = vxor.u32 %v965, 2147483648
    %v980 = vmul.f32 %v979, 1.442695
    %v981 = vpow.pop %v980
    %v982 = vadd.f32 %v981, 1.0
    %v983 = vrcp.pop %v982
    %v984 = vmul.f32 1.0, %v983
    %v985 = vmul.f32 %v977, %v815
    %v986 = vmul.f32 %v971, %v978
    %v987 = vadd.f32 %v985, %v986
    %v988 = vtanh.pop %v987
    %v989 = vmul.f32 %v984, %v988
    %s990 = scalar_lea.vmem [#allocation4], 32
    %991 = vst [vmem:[%s990] sm:$0xff] %v989
    %992 = vmatprep.subr.mxu0 %v68
    %993 = vmatpush1.msra.mxu0 %v67
    %994 = vmatprep.subr.mxu0 %v72
    %995 = vmatpush1.msra.mxu0 %v71
    %996 = vmatprep.subr.mxu0 %v76
    %997 = vmatpush1.msra.mxu0 %v75
    %998 = vmatprep.subr.mxu0 %v80
    %999 = vmatpush1.msra.mxu0 %v79
    %1000 = vmatprep.subr.mxu0 %v84
    %1001 = vmatpush1.msra.mxu0 %v83
    %1002 = vmatprep.subr.mxu0 %v88
    %1003 = vmatpush1.msra.mxu0 %v87
    %1004 = vmatprep.subr.mxu0 %v92
    %1005 = vmatpush1.msra.mxu0 %v91
    %1006 = vmatprep.subr.mxu0 %v96
    %1007 = vmatpush1.msra.mxu0 %v95
    %1008 = vmatprep.subr.mxu0 %v100
    %1009 = vmatpush1.msra.mxu0 %v99
    %1010 = vmatprep.subr.mxu0 %v104
    %1011 = vmatpush1.msra.mxu0 %v103
    %1012 = vmatprep.subr.mxu0 %v108
    %1013 = vmatpush1.msra.mxu0 %v107
    %1014 = vmatprep.subr.mxu0 %v112
    %1015 = vmatpush1.msra.mxu0 %v111
    %1016 = vmatprep.subr.mxu0 %v116
    %1017 = vmatpush1.msra.mxu0 %v115
    %1018 = vmatprep.subr.mxu0 %v120
    %1019 = vmatpush1.msra.mxu0 %v119
    %1020 = vmatprep.subr.mxu0 %v124
    %1021 = vmatpush1.msra.mxu0 %v123
    %1022 = vmatprep.subr.mxu0 %v128
    %1023 = vmatpush1.msra.mxu0 %v127
    %1024 = vmatprep.subr.mxu0 0.0
    %1025 = vmatpush1.msra.mxu0 0.0
    %1026 = vmatprep.subr.mxu0 0.0
    %1027 = vmatpush1.msra.mxu0 0.0
    %1028 = vmatprep.subr.mxu0 0.0
    %1029 = vmatpush1.msra.mxu0 0.0
    %1030 = vmatprep.subr.mxu0 0.0
    %1031 = vmatpush1.msra.mxu0 0.0
    %1032 = vmatprep.subr.mxu0 0.0
    %1033 = vmatpush1.msra.mxu0 0.0
    %1034 = vmatprep.subr.mxu0 0.0
    %1035 = vmatpush1.msra.mxu0 0.0
    %1036 = vmatprep.subr.mxu0 0.0
    %1037 = vmatpush1.msra.mxu0 0.0
    %1038 = vmatprep.subr.mxu0 0.0
    %1039 = vmatpush1.msra.mxu0 0.0
    %1040 = vmatprep.subr.mxu0 0.0
    %1041 = vmatpush1.msra.mxu0 0.0
    %1042 = vmatprep.subr.mxu0 0.0
    %1043 = vmatpush1.msra.mxu0 0.0
    %1044 = vmatprep.subr.mxu0 0.0
    %1045 = vmatpush1.msra.mxu0 0.0
    %1046 = vmatprep.subr.mxu0 0.0
    %1047 = vmatpush1.msra.mxu0 0.0
    %1048 = vmatprep.subr.mxu0 0.0
    %1049 = vmatpush1.msra.mxu0 0.0
    %1050 = vmatprep.subr.mxu0 0.0
    %1051 = vmatpush1.msra.mxu0 0.0
    %1052 = vmatprep.subr.mxu0 0.0
    %1053 = vmatpush1.msra.mxu0 0.0
    %1054 = vmatprep.subr.mxu0 0.0
    %1055 = vmatpush1.msra.mxu0 0.0
    %1056 = vmatprep.mubr.f32.mxu0 0.0
    %1057 = vmatmul.mubr.f32.gmra.mrb[0].mxu0 %v989
    %v1058 = vpop.f32.mrb[0].mxu0
    %v1059 = vadd.f32 0.0, %v1058
    %v1060 = vpop.f32.mrb[0].mxu0
    %v1061 = vadd.f32 0.0, %v1060
    %1062 = vdwg.mxu0
    %1063 = vmatprep.subr.mxu0 %v70
    %1064 = vmatpush1.msra.mxu0 %v69
    %1065 = vmatprep.subr.mxu0 %v74
    %1066 = vmatpush1.msra.mxu0 %v73
    %1067 = vmatprep.subr.mxu0 %v78
    %1068 = vmatpush1.msra.mxu0 %v77
    %1069 = vmatprep.subr.mxu0 %v82
    %1070 = vmatpush1.msra.mxu0 %v81
    %1071 = vmatprep.subr.mxu0 %v86
    %1072 = vmatpush1.msra.mxu0 %v85
    %1073 = vmatprep.subr.mxu0 %v90
    %1074 = vmatpush1.msra.mxu0 %v89
    %1075 = vmatprep.subr.mxu0 %v94
    %1076 = vmatpush1.msra.mxu0 %v93
    %1077 = vmatprep.subr.mxu0 %v98
    %1078 = vmatpush1.msra.mxu0 %v97
    %1079 = vmatprep.subr.mxu0 %v102
    %1080 = vmatpush1.msra.mxu0 %v101
    %1081 = vmatprep.subr.mxu0 %v106
    %1082 = vmatpush1.msra.mxu0 %v105
    %1083 = vmatprep.subr.mxu0 %v110
    %1084 = vmatpush1.msra.mxu0 %v109
    %1085 = vmatprep.subr.mxu0 %v114
    %1086 = vmatpush1.msra.mxu0 %v113
    %1087 = vmatprep.subr.mxu0 %v118
    %1088 = vmatpush1.msra.mxu0 %v117
    %1089 = vmatprep.subr.mxu0 %v122
    %1090 = vmatpush1.msra.mxu0 %v121
    %1091 = vmatprep.subr.mxu0 %v126
    %1092 = vmatpush1.msra.mxu0 %v125
    %1093 = vmatprep.subr.mxu0 %v130
    %1094 = vmatpush1.msra.mxu0 %v129
    %1095 = vmatprep.subr.mxu0 0.0
    %1096 = vmatpush1.msra.mxu0 0.0
    %1097 = vmatprep.subr.mxu0 0.0
    %1098 = vmatpush1.msra.mxu0 0.0
    %1099 = vmatprep.subr.mxu0 0.0
    %1100 = vmatpush1.msra.mxu0 0.0
    %1101 = vmatprep.subr.mxu0 0.0
    %1102 = vmatpush1.msra.mxu0 0.0
    %1103 = vmatprep.subr.mxu0 0.0
    %1104 = vmatpush1.msra.mxu0 0.0
    %1105 = vmatprep.subr.mxu0 0.0
    %1106 = vmatpush1.msra.mxu0 0.0
    %1107 = vmatprep.subr.mxu0 0.0
    %1108 = vmatpush1.msra.mxu0 0.0
    %1109 = vmatprep.subr.mxu0 0.0
    %1110 = vmatpush1.msra.mxu0 0.0
    %1111 = vmatprep.subr.mxu0 0.0
    %1112 = vmatpush1.msra.mxu0 0.0
    %1113 = vmatprep.subr.mxu0 0.0
    %1114 = vmatpush1.msra.mxu0 0.0
    %1115 = vmatprep.subr.mxu0 0.0
    %1116 = vmatpush1.msra.mxu0 0.0
    %1117 = vmatprep.subr.mxu0 0.0
    %1118 = vmatpush1.msra.mxu0 0.0
    %1119 = vmatprep.subr.mxu0 0.0
    %1120 = vmatpush1.msra.mxu0 0.0
    %1121 = vmatprep.subr.mxu0 0.0
    %1122 = vmatpush1.msra.mxu0 0.0
    %1123 = vmatprep.subr.mxu0 0.0
    %1124 = vmatpush1.msra.mxu0 0.0
    %1125 = vmatprep.subr.mxu0 0.0
    %1126 = vmatpush1.msra.mxu0 0.0
    %1127 = vmatprep.mubr.f32.mxu0 0.0
    %1128 = vmatmul.mubr.f32.gmra.mrb[0].mxu0 %v989
    %v1129 = vpop.f32.mrb[0].mxu0
    %v1130 = vadd.f32 0.0, %v1129
    %v1131 = vpop.f32.mrb[0].mxu0
    %v1132 = vadd.f32 0.0, %v1131
    %1133 = vdwg.mxu0
    %v1134 = vadd.f32 %v63, %v1059
    %v1135 = vadd.f32 %v64, %v1061
    %v1136 = vadd.f32 %v65, %v1130
    %v1137 = vadd.f32 %v66, %v1132
    %v1138 = vxor.u32 %v1134, 2147483648
    %v1139 = vmul.f32 %v1138, 1.442695
    %v1140 = vpow.pop %v1139
    %v1141 = vadd.f32 %v1140, 1.0
    %v1142 = vrcp.pop %v1141
    %v1143 = vmul.f32 1.0, %v1142
    %v1144 = vxor.u32 %v1135, 2147483648
    %v1145 = vmul.f32 %v1144, 1.442695
    %v1146 = vpow.pop %v1145
    %v1147 = vadd.f32 %v1146, 1.0
    %v1148 = vrcp.pop %v1147
    %v1149 = vmul.f32 1.0, %v1148
    %v1150 = vtanh.pop %v1136
    %v1151 = vxor.u32 %v1137, 2147483648
    %v1152 = vmul.f32 %v1151, 1.442695
    %v1153 = vpow.pop %v1152
    %v1154 = vadd.f32 %v1153, 1.0
    %v1155 = vrcp.pop %v1154
    %v1156 = vmul.f32 1.0, %v1155
    %v1157 = vmul.f32 %v1149, %v987
    %v1158 = vmul.f32 %v1143, %v1150
    %v1159 = vadd.f32 %v1157, %v1158
    %v1160 = vtanh.pop %v1159
    %v1161 = vmul.f32 %v1156, %v1160
    %s1162 = scalar_lea.vmem [#allocation4], 40
    %1163 = vst [vmem:[%s1162] sm:$0xff] %v1161
    %1164 = vmatprep.subr.mxu0 %v68
    %1165 = vmatpush1.msra.mxu0 %v67
    %1166 = vmatprep.subr.mxu0 %v72
    %1167 = vmatpush1.msra.mxu0 %v71
    %1168 = vmatprep.subr.mxu0 %v76
    %1169 = vmatpush1.msra.mxu0 %v75
    %1170 = vmatprep.subr.mxu0 %v80
    %1171 = vmatpush1.msra.mxu0 %v79
    %1172 = vmatprep.subr.mxu0 %v84
    %1173 = vmatpush1.msra.mxu0 %v83
    %1174 = vmatprep.subr.mxu0 %v88
    %1175 = vmatpush1.msra.mxu0 %v87
    %1176 = vmatprep.subr.mxu0 %v92
    %1177 = vmatpush1.msra.mxu0 %v91
    %1178 = vmatprep.subr.mxu0 %v96
    %1179 = vmatpush1.msra.mxu0 %v95
    %1180 = vmatprep.subr.mxu0 %v100
    %1181 = vmatpush1.msra.mxu0 %v99
    %1182 = vmatprep.subr.mxu0 %v104
    %1183 = vmatpush1.msra.mxu0 %v103
    %1184 = vmatprep.subr.mxu0 %v108
    %1185 = vmatpush1.msra.mxu0 %v107
    %1186 = vmatprep.subr.mxu0 %v112
    %1187 = vmatpush1.msra.mxu0 %v111
    %1188 = vmatprep.subr.mxu0 %v116
    %1189 = vmatpush1.msra.mxu0 %v115
    %1190 = vmatprep.subr.mxu0 %v120
    %1191 = vmatpush1.msra.mxu0 %v119
    %1192 = vmatprep.subr.mxu0 %v124
    %1193 = vmatpush1.msra.mxu0 %v123
    %1194 = vmatprep.subr.mxu0 %v128
    %1195 = vmatpush1.msra.mxu0 %v127
    %1196 = vmatprep.subr.mxu0 0.0
    %1197 = vmatpush1.msra.mxu0 0.0
    %1198 = vmatprep.subr.mxu0 0.0
    %1199 = vmatpush1.msra.mxu0 0.0
    %1200 = vmatprep.subr.mxu0 0.0
    %1201 = vmatpush1.msra.mxu0 0.0
    %1202 = vmatprep.subr.mxu0 0.0
    %1203 = vmatpush1.msra.mxu0 0.0
    %1204 = vmatprep.subr.mxu0 0.0
    %1205 = vmatpush1.msra.mxu0 0.0
    %1206 = vmatprep.subr.mxu0 0.0
    %1207 = vmatpush1.msra.mxu0 0.0
    %1208 = vmatprep.subr.mxu0 0.0
    %1209 = vmatpush1.msra.mxu0 0.0
    %1210 = vmatprep.subr.mxu0 0.0
    %1211 = vmatpush1.msra.mxu0 0.0
    %1212 = vmatprep.subr.mxu0 0.0
    %1213 = vmatpush1.msra.mxu0 0.0
    %1214 = vmatprep.subr.mxu0 0.0
    %1215 = vmatpush1.msra.mxu0 0.0
    %1216 = vmatprep.subr.mxu0 0.0
    %1217 = vmatpush1.msra.mxu0 0.0
    %1218 = vmatprep.subr.mxu0 0.0
    %1219 = vmatpush1.msra.mxu0 0.0
    %1220 = vmatprep.subr.mxu0 0.0
    %1221 = vmatpush1.msra.mxu0 0.0
    %1222 = vmatprep.subr.mxu0 0.0
    %1223 = vmatpush1.msra.mxu0 0.0
    %1224 = vmatprep.subr.mxu0 0.0
    %1225 = vmatpush1.msra.mxu0 0.0
    %1226 = vmatprep.subr.mxu0 0.0
    %1227 = vmatpush1.msra.mxu0 0.0
    %1228 = vmatprep.mubr.f32.mxu0 0.0
    %1229 = vmatmul.mubr.f32.gmra.mrb[0].mxu0 %v1161
    %v1230 = vpop.f32.mrb[0].mxu0
    %v1231 = vadd.f32 0.0, %v1230
    %v1232 = vpop.f32.mrb[0].mxu0
    %v1233 = vadd.f32 0.0, %v1232
    %1234 = vdwg.mxu0
    %1235 = vmatprep.subr.mxu0 %v70
    %1236 = vmatpush1.msra.mxu0 %v69
    %1237 = vmatprep.subr.mxu0 %v74
    %1238 = vmatpush1.msra.mxu0 %v73
    %1239 = vmatprep.subr.mxu0 %v78
    %1240 = vmatpush1.msra.mxu0 %v77
    %1241 = vmatprep.subr.mxu0 %v82
    %1242 = vmatpush1.msra.mxu0 %v81
    %1243 = vmatprep.subr.mxu0 %v86
    %1244 = vmatpush1.msra.mxu0 %v85
    %1245 = vmatprep.subr.mxu0 %v90
    %1246 = vmatpush1.msra.mxu0 %v89
    %1247 = vmatprep.subr.mxu0 %v94
    %1248 = vmatpush1.msra.mxu0 %v93
    %1249 = vmatprep.subr.mxu0 %v98
    %1250 = vmatpush1.msra.mxu0 %v97
    %1251 = vmatprep.subr.mxu0 %v102
    %1252 = vmatpush1.msra.mxu0 %v101
    %1253 = vmatprep.subr.mxu0 %v106
    %1254 = vmatpush1.msra.mxu0 %v105
    %1255 = vmatprep.subr.mxu0 %v110
    %1256 = vmatpush1.msra.mxu0 %v109
    %1257 = vmatprep.subr.mxu0 %v114
    %1258 = vmatpush1.msra.mxu0 %v113
    %1259 = vmatprep.subr.mxu0 %v118
    %1260 = vmatpush1.msra.mxu0 %v117
    %1261 = vmatprep.subr.mxu0 %v122
    %1262 = vmatpush1.msra.mxu0 %v121
    %1263 = vmatprep.subr.mxu0 %v126
    %1264 = vmatpush1.msra.mxu0 %v125
    %1265 = vmatprep.subr.mxu0 %v130
    %1266 = vmatpush1.msra.mxu0 %v129
    %1267 = vmatprep.subr.mxu0 0.0
    %1268 = vmatpush1.msra.mxu0 0.0
    %1269 = vmatprep.subr.mxu0 0.0
    %1270 = vmatpush1.msra.mxu0 0.0
    %1271 = vmatprep.subr.mxu0 0.0
    %1272 = vmatpush1.msra.mxu0 0.0
    %1273 = vmatprep.subr.mxu0 0.0
    %1274 = vmatpush1.msra.mxu0 0.0
    %1275 = vmatprep.subr.mxu0 0.0
    %1276 = vmatpush1.msra.mxu0 0.0
    %1277 = vmatprep.subr.mxu0 0.0
    %1278 = vmatpush1.msra.mxu0 0.0
    %1279 = vmatprep.subr.mxu0 0.0
    %1280 = vmatpush1.msra.mxu0 0.0
    %1281 = vmatprep.subr.mxu0 0.0
    %1282 = vmatpush1.msra.mxu0 0.0
    %1283 = vmatprep.subr.mxu0 0.0
    %1284 = vmatpush1.msra.mxu0 0.0
    %1285 = vmatprep.subr.mxu0 0.0
    %1286 = vmatpush1.msra.mxu0 0.0
    %1287 = vmatprep.subr.mxu0 0.0
    %1288 = vmatpush1.msra.mxu0 0.0
    %1289 = vmatprep.subr.mxu0 0.0
    %1290 = vmatpush1.msra.mxu0 0.0
    %1291 = vmatprep.subr.mxu0 0.0
    %1292 = vmatpush1.msra.mxu0 0.0
    %1293 = vmatprep.subr.mxu0 0.0
    %1294 = vmatpush1.msra.mxu0 0.0
    %1295 = vmatprep.subr.mxu0 0.0
    %1296 = vmatpush1.msra.mxu0 0.0
    %1297 = vmatprep.subr.mxu0 0.0
    %1298 = vmatpush1.msra.mxu0 0.0
    %1299 = vmatprep.mubr.f32.mxu0 0.0
    %1300 = vmatmul.mubr.f32.gmra.mrb[0].mxu0 %v1161
    %v1301 = vpop.f32.mrb[0].mxu0
    %v1302 = vadd.f32 0.0, %v1301
    %v1303 = vpop.f32.mrb[0].mxu0
    %v1304 = vadd.f32 0.0, %v1303
    %1305 = vdwg.mxu0
    %v1306 = vadd.f32 %v63, %v1231
    %v1307 = vadd.f32 %v64, %v1233
    %v1308 = vadd.f32 %v65, %v1302
    %v1309 = vadd.f32 %v66, %v1304
    %v1310 = vxor.u32 %v1306, 2147483648
    %v1311 = vmul.f32 %v1310, 1.442695
    %v1312 = vpow.pop %v1311
    %v1313 = vadd.f32 %v1312, 1.0
    %v1314 = vrcp.pop %v1313
    %v1315 = vmul.f32 1.0, %v1314
    %v1316 = vxor.u32 %v1307, 2147483648
    %v1317 = vmul.f32 %v1316, 1.442695
    %v1318 = vpow.pop %v1317
    %v1319 = vadd.f32 %v1318, 1.0
    %v1320 = vrcp.pop %v1319
    %v1321 = vmul.f32 1.0, %v1320
    %v1322 = vtanh.pop %v1308
    %v1323 = vxor.u32 %v1309, 2147483648
    %v1324 = vmul.f32 %v1323, 1.442695
    %v1325 = vpow.pop %v1324
    %v1326 = vadd.f32 %v1325, 1.0
    %v1327 = vrcp.pop %v1326
    %v1328 = vmul.f32 1.0, %v1327
    %v1329 = vmul.f32 %v1321, %v1159
    %v1330 = vmul.f32 %v1315, %v1322
    %v1331 = vadd.f32 %v1329, %v1330
    %v1332 = vtanh.pop %v1331
    %v1333 = vmul.f32 %v1328, %v1332
    %s1334 = scalar_lea.vmem [#allocation4], 48
    %1335 = vst [vmem:[%s1334] sm:$0xff] %v1333
    %1336 = vmatprep.subr.mxu0 %v68
    %1337 = vmatpush1.msra.mxu0 %v67
    %1338 = vmatprep.subr.mxu0 %v72
    %1339 = vmatpush1.msra.mxu0 %v71
    %1340 = vmatprep.subr.mxu0 %v76
    %1341 = vmatpush1.msra.mxu0 %v75
    %1342 = vmatprep.subr.mxu0 %v80
    %1343 = vmatpush1.msra.mxu0 %v79
    %1344 = vmatprep.subr.mxu0 %v84
    %1345 = vmatpush1.msra.mxu0 %v83
    %1346 = vmatprep.subr.mxu0 %v88
    %1347 = vmatpush1.msra.mxu0 %v87
    %1348 = vmatprep.subr.mxu0 %v92
    %1349 = vmatpush1.msra.mxu0 %v91
    %1350 = vmatprep.subr.mxu0 %v96
    %1351 = vmatpush1.msra.mxu0 %v95
    %1352 = vmatprep.subr.mxu0 %v100
    %1353 = vmatpush1.msra.mxu0 %v99
    %1354 = vmatprep.subr.mxu0 %v104
    %1355 = vmatpush1.msra.mxu0 %v103
    %1356 = vmatprep.subr.mxu0 %v108
    %1357 = vmatpush1.msra.mxu0 %v107
    %1358 = vmatprep.subr.mxu0 %v112
    %1359 = vmatpush1.msra.mxu0 %v111
    %1360 = vmatprep.subr.mxu0 %v116
    %1361 = vmatpush1.msra.mxu0 %v115
    %1362 = vmatprep.subr.mxu0 %v120
    %1363 = vmatpush1.msra.mxu0 %v119
    %1364 = vmatprep.subr.mxu0 %v124
    %1365 = vmatpush1.msra.mxu0 %v123
    %1366 = vmatprep.subr.mxu0 %v128
    %1367 = vmatpush1.msra.mxu0 %v127
    %1368 = vmatprep.subr.mxu0 0.0
    %1369 = vmatpush1.msra.mxu0 0.0
    %1370 = vmatprep.subr.mxu0 0.0
    %1371 = vmatpush1.msra.mxu0 0.0
    %1372 = vmatprep.subr.mxu0 0.0
    %1373 = vmatpush1.msra.mxu0 0.0
    %1374 = vmatprep.subr.mxu0 0.0
    %1375 = vmatpush1.msra.mxu0 0.0
    %1376 = vmatprep.subr.mxu0 0.0
    %1377 = vmatpush1.msra.mxu0 0.0
    %1378 = vmatprep.subr.mxu0 0.0
    %1379 = vmatpush1.msra.mxu0 0.0
    %1380 = vmatprep.subr.mxu0 0.0
    %1381 = vmatpush1.msra.mxu0 0.0
    %1382 = vmatprep.subr.mxu0 0.0
    %1383 = vmatpush1.msra.mxu0 0.0
    %1384 = vmatprep.subr.mxu0 0.0
    %1385 = vmatpush1.msra.mxu0 0.0
    %1386 = vmatprep.subr.mxu0 0.0
    %1387 = vmatpush1.msra.mxu0 0.0
    %1388 = vmatprep.subr.mxu0 0.0
    %1389 = vmatpush1.msra.mxu0 0.0
    %1390 = vmatprep.subr.mxu0 0.0
    %1391 = vmatpush1.msra.mxu0 0.0
    %1392 = vmatprep.subr.mxu0 0.0
    %1393 = vmatpush1.msra.mxu0 0.0
    %1394 = vmatprep.subr.mxu0 0.0
    %1395 = vmatpush1.msra.mxu0 0.0
    %1396 = vmatprep.subr.mxu0 0.0
    %1397 = vmatpush1.msra.mxu0 0.0
    %1398 = vmatprep.subr.mxu0 0.0
    %1399 = vmatpush1.msra.mxu0 0.0
    %1400 = vmatprep.mubr.f32.mxu0 0.0
    %1401 = vmatmul.mubr.f32.gmra.mrb[0].mxu0 %v1333
    %v1402 = vpop.f32.mrb[0].mxu0
    %v1403 = vadd.f32 0.0, %v1402
    %v1404 = vpop.f32.mrb[0].mxu0
    %v1405 = vadd.f32 0.0, %v1404
    %1406 = vdwg.mxu0
    %1407 = vmatprep.subr.mxu0 %v70
    %1408 = vmatpush1.msra.mxu0 %v69
    %1409 = vmatprep.subr.mxu0 %v74
    %1410 = vmatpush1.msra.mxu0 %v73
    %1411 = vmatprep.subr.mxu0 %v78
    %1412 = vmatpush1.msra.mxu0 %v77
    %1413 = vmatprep.subr.mxu0 %v82
    %1414 = vmatpush1.msra.mxu0 %v81
    %1415 = vmatprep.subr.mxu0 %v86
    %1416 = vmatpush1.msra.mxu0 %v85
    %1417 = vmatprep.subr.mxu0 %v90
    %1418 = vmatpush1.msra.mxu0 %v89
    %1419 = vmatprep.subr.mxu0 %v94
    %1420 = vmatpush1.msra.mxu0 %v93
    %1421 = vmatprep.subr.mxu0 %v98
    %1422 = vmatpush1.msra.mxu0 %v97
    %1423 = vmatprep.subr.mxu0 %v102
    %1424 = vmatpush1.msra.mxu0 %v101
    %1425 = vmatprep.subr.mxu0 %v106
    %1426 = vmatpush1.msra.mxu0 %v105
    %1427 = vmatprep.subr.mxu0 %v110
    %1428 = vmatpush1.msra.mxu0 %v109
    %1429 = vmatprep.subr.mxu0 %v114
    %1430 = vmatpush1.msra.mxu0 %v113
    %1431 = vmatprep.subr.mxu0 %v118
    %1432 = vmatpush1.msra.mxu0 %v117
    %1433 = vmatprep.subr.mxu0 %v122
    %1434 = vmatpush1.msra.mxu0 %v121
    %1435 = vmatprep.subr.mxu0 %v126
    %1436 = vmatpush1.msra.mxu0 %v125
    %1437 = vmatprep.subr.mxu0 %v130
    %1438 = vmatpush1.msra.mxu0 %v129
    %1439 = vmatprep.subr.mxu0 0.0
    %1440 = vmatpush1.msra.mxu0 0.0
    %1441 = vmatprep.subr.mxu0 0.0
    %1442 = vmatpush1.msra.mxu0 0.0
    %1443 = vmatprep.subr.mxu0 0.0
    %1444 = vmatpush1.msra.mxu0 0.0
    %1445 = vmatprep.subr.mxu0 0.0
    %1446 = vmatpush1.msra.mxu0 0.0
    %1447 = vmatprep.subr.mxu0 0.0
    %1448 = vmatpush1.msra.mxu0 0.0
    %1449 = vmatprep.subr.mxu0 0.0
    %1450 = vmatpush1.msra.mxu0 0.0
    %1451 = vmatprep.subr.mxu0 0.0
    %1452 = vmatpush1.msra.mxu0 0.0
    %1453 = vmatprep.subr.mxu0 0.0
    %1454 = vmatpush1.msra.mxu0 0.0
    %1455 = vmatprep.subr.mxu0 0.0
    %1456 = vmatpush1.msra.mxu0 0.0
    %1457 = vmatprep.subr.mxu0 0.0
    %1458 = vmatpush1.msra.mxu0 0.0
    %1459 = vmatprep.subr.mxu0 0.0
    %1460 = vmatpush1.msra.mxu0 0.0
    %1461 = vmatprep.subr.mxu0 0.0
    %1462 = vmatpush1.msra.mxu0 0.0
    %1463 = vmatprep.subr.mxu0 0.0
    %1464 = vmatpush1.msra.mxu0 0.0
    %1465 = vmatprep.subr.mxu0 0.0
    %1466 = vmatpush1.msra.mxu0 0.0
    %1467 = vmatprep.subr.mxu0 0.0
    %1468 = vmatpush1.msra.mxu0 0.0
    %1469 = vmatprep.subr.mxu0 0.0
    %1470 = vmatpush1.msra.mxu0 0.0
    %1471 = vmatprep.mubr.f32.mxu0 0.0
    %1472 = vmatmul.mubr.f32.gmra.mrb[0].mxu0 %v1333
    %v1473 = vpop.f32.mrb[0].mxu0
    %v1474 = vadd.f32 0.0, %v1473
    %v1475 = vpop.f32.mrb[0].mxu0
    %v1476 = vadd.f32 0.0, %v1475
    %1477 = vdwg.mxu0
    %v1478 = vadd.f32 %v63, %v1403
    %v1479 = vadd.f32 %v64, %v1405
    %v1480 = vadd.f32 %v65, %v1474
    %v1481 = vadd.f32 %v66, %v1476
    %v1482 = vxor.u32 %v1478, 2147483648
    %v1483 = vmul.f32 %v1482, 1.442695
    %v1484 = vpow.pop %v1483
    %v1485 = vadd.f32 %v1484, 1.0
    %v1486 = vrcp.pop %v1485
    %v1487 = vmul.f32 1.0, %v1486
    %v1488 = vxor.u32 %v1479, 2147483648
    %v1489 = vmul.f32 %v1488, 1.442695
    %v1490 = vpow.pop %v1489
    %v1491 = vadd.f32 %v1490, 1.0
    %v1492 = vrcp.pop %v1491
    %v1493 = vmul.f32 1.0, %v1492
    %v1494 = vtanh.pop %v1480
    %v1495 = vxor.u32 %v1481, 2147483648
    %v1496 = vmul.f32 %v1495, 1.442695
    %v1497 = vpow.pop %v1496
    %v1498 = vadd.f32 %v1497, 1.0
    %v1499 = vrcp.pop %v1498
    %v1500 = vmul.f32 1.0, %v1499
    %v1501 = vmul.f32 %v1493, %v1331
    %v1502 = vmul.f32 %v1487, %v1494
    %v1503 = vadd.f32 %v1501, %v1502
    %v1504 = vtanh.pop %v1503
    %v1505 = vmul.f32 %v1500, %v1504
    %s1506 = scalar_lea.vmem [#allocation4], 56
    %1507 = vst [vmem:[%s1506] sm:$0xff] %v1505
    %1508 = vst [vmem:[#allocation2] sm:$0xff] %v1505
    %1509 = vst [vmem:[#allocation3] sm:$0xff] %v1503
    %v1510 = vld [vmem:[#allocation4] sm:$0xff]
    %v1511 = vld [vmem:[#allocation4 + $0x8] sm:$0xff]
    %v1512 = vld [vmem:[#allocation4 + $0x10] sm:$0xff]
    %v1513 = vld [vmem:[#allocation4 + $0x18] sm:$0xff]
    %v1514 = vld [vmem:[#allocation4 + $0x20] sm:$0xff]
    %v1515 = vld [vmem:[#allocation4 + $0x28] sm:$0xff]
    %v1516 = vld [vmem:[#allocation4 + $0x30] sm:$0xff]
    %v1517 = vld [vmem:[#allocation4 + $0x38] sm:$0xff]
    %v1518 = vld [vmem:[#allocation10] sm:$0xff]
    %v1519 = vld [vmem:[#allocation10 + $0x8] sm:$0xff]
    %v1520 = vld [vmem:[#allocation10 + $0x10] sm:$0xff]
    %v1521 = vld [vmem:[#allocation10 + $0x18] sm:$0xff]
    %v1522 = vld [vmem:[#allocation10 + $0x20] sm:$0xff]
    %v1523 = vld [vmem:[#allocation10 + $0x28] sm:$0xff]
    %v1524 = vld [vmem:[#allocation10 + $0x30] sm:$0xff]
    %v1525 = vld [vmem:[#allocation10 + $0x38] sm:$0xff]
    %v1526 = vld [vmem:[#allocation10 + $0x40] sm:$0xff]
    %v1527 = vld [vmem:[#allocation10 + $0x48] sm:$0xff]
    %v1528 = vld [vmem:[#allocation10 + $0x50] sm:$0xff]
    %v1529 = vld [vmem:[#allocation10 + $0x58] sm:$0xff]
    %v1530 = vld [vmem:[#allocation10 + $0x60] sm:$0xff]
    %v1531 = vld [vmem:[#allocation10 + $0x68] sm:$0xff]
    %v1532 = vld [vmem:[#allocation10 + $0x70] sm:$0xff]
    %v1533 = vld [vmem:[#allocation10 + $0x78] sm:$0xff]
    %v1534 = vld [vmem:[#allocation10 + $0x80] sm:$0xff]
    %v1535 = vld [vmem:[#allocation10 + $0x88] sm:$0xff]
    %v1536 = vld [vmem:[#allocation10 + $0x90] sm:$0xff]
    %v1537 = vld [vmem:[#allocation10 + $0x98] sm:$0xff]
    %v1538 = vld [vmem:[#allocation10 + $0xa0] sm:$0xff]
    %v1539 = vld [vmem:[#allocation10 + $0xa8] sm:$0xff]
    %v1540 = vld [vmem:[#allocation10 + $0xb0] sm:$0xff]
    %v1541 = vld [vmem:[#allocation10 + $0xb8] sm:$0xff]
    %v1542 = vld [vmem:[#allocation10 + $0xc0] sm:$0xff]
    %v1543 = vld [vmem:[#allocation10 + $0xc8] sm:$0xff]
    %v1544 = vld [vmem:[#allocation10 + $0xd0] sm:$0xff]
    %v1545 = vld [vmem:[#allocation10 + $0xd8] sm:$0xff]
    %v1546 = vld [vmem:[#allocation10 + $0xe0] sm:$0xff]
    %v1547 = vld [vmem:[#allocation10 + $0xe8] sm:$0xff]
    %v1548 = vld [vmem:[#allocation10 + $0xf0] sm:$0xff]
    %v1549 = vld [vmem:[#allocation10 + $0xf8] sm:$0xff]
    %v1550 = vld [vmem:[%s3] sm:$0x3]
    %v1552 = vlaneseq
    %v1553 = vshrl.u32 %v1552, 7
    %v1554 = vsub.s32 0, %v1553
    %v1555 = vrot.slane %v1550, %v1554
    %v1556 = vlaneseq
    %v1557 = vshrl.u32 %v1556, 7
    %v1558 = vsub.s32 1, %v1557
    %v1559 = vrot.slane %v1550, %v1558
    %1562 = vmatprep.subr.mxu0 %v1519
    %1563 = vmatpush1.msra.mxu0 %v1518
    %1564 = vmatprep.subr.mxu0 %v1521
    %1565 = vmatpush1.msra.mxu0 %v1520
    %1566 = vmatprep.subr.mxu0 %v1523
    %1567 = vmatpush1.msra.mxu0 %v1522
    %1568 = vmatprep.subr.mxu0 %v1525
    %1569 = vmatpush1.msra.mxu0 %v1524
    %1570 = vmatprep.subr.mxu0 %v1527
    %1571 = vmatpush1.msra.mxu0 %v1526
    %1572 = vmatprep.subr.mxu0 %v1529
    %1573 = vmatpush1.msra.mxu0 %v1528
    %1574 = vmatprep.subr.mxu0 %v1531
    %1575 = vmatpush1.msra.mxu0 %v1530
    %1576 = vmatprep.subr.mxu0 %v1533
    %1577 = vmatpush1.msra.mxu0 %v1532
    %1578 = vmatprep.subr.mxu0 %v1535
    %1579 = vmatpush1.msra.mxu0 %v1534
    %1580 = vmatprep.subr.mxu0 %v1537
    %1581 = vmatpush1.msra.mxu0 %v1536
    %1582 = vmatprep.subr.mxu0 %v1539
    %1583 = vmatpush1.msra.mxu0 %v1538
    %1584 = vmatprep.subr.mxu0 %v1541
    %1585 = vmatpush1.msra.mxu0 %v1540
    %1586 = vmatprep.subr.mxu0 %v1543
    %1587 = vmatpush1.msra.mxu0 %v1542
    %1588 = vmatprep.subr.mxu0 %v1545
    %1589 = vmatpush1.msra.mxu0 %v1544
    %1590 = vmatprep.subr.mxu0 %v1547
    %1591 = vmatpush1.msra.mxu0 %v1546
    %1592 = vmatprep.subr.mxu0 %v1549
    %1593 = vmatpush1.msra.mxu0 %v1548
    %1594 = vmatprep.subr.mxu0 0.0
    %1595 = vmatpush1.msra.mxu0 0.0
    %1596 = vmatprep.subr.mxu0 0.0
    %1597 = vmatpush1.msra.mxu0 0.0
    %1598 = vmatprep.subr.mxu0 0.0
    %1599 = vmatpush1.msra.mxu0 0.0
    %1600 = vmatprep.subr.mxu0 0.0
    %1601 = vmatpush1.msra.mxu0 0.0
    %1602 = vmatprep.subr.mxu0 0.0
    %1603 = vmatpush1.msra.mxu0 0.0
    %1604 = vmatprep.subr.mxu0 0.0
    %1605 = vmatpush1.msra.mxu0 0.0
    %1606 = vmatprep.subr.mxu0 0.0
    %1607 = vmatpush1.msra.mxu0 0.0
    %1608 = vmatprep.subr.mxu0 0.0
    %1609 = vmatpush1.msra.mxu0 0.0
    %1610 = vmatprep.subr.mxu0 0.0
    %1611 = vmatpush1.msra.mxu0 0.0
    %1612 = vmatprep.subr.mxu0 0.0
    %1613 = vmatpush1.msra.mxu0 0.0
    %1614 = vmatprep.subr.mxu0 0.0
    %1615 = vmatpush1.msra.mxu0 0.0
    %1616 = vmatprep.subr.mxu0 0.0
    %1617 = vmatpush1.msra.mxu0 0.0
    %1618 = vmatprep.subr.mxu0 0.0
    %1619 = vmatpush1.msra.mxu0 0.0
    %1620 = vmatprep.subr.mxu0 0.0
    %1621 = vmatpush1.msra.mxu0 0.0
    %1622 = vmatprep.subr.mxu0 0.0
    %1623 = vmatpush1.msra.mxu0 0.0
    %1624 = vmatprep.subr.mxu0 0.0
    %1625 = vmatpush1.msra.mxu0 0.0
    %1626 = vmatprep.mubr.f32.mxu0 0.0
    %1627 = vmatmul.mubr.f32.gmra.mrb[0].mxu0 %v1510
    %v1628 = vpop.f32.mrb[0].mxu0
    %v1629 = vadd.f32 %v1555, %v1628
    %v1630 = vpop.f32.mrb[0].mxu0
    %v1631 = vadd.f32 %v1559, %v1630
    %1632 = vmatprep.mubr.f32.mxu0 0.0
    %1633 = vmatmul.mubr.f32.gmra.mrb[0].mxu0 %v1511
    %v1634 = vpop.f32.mrb[0].mxu0
    %v1635 = vadd.f32 %v1555, %v1634
    %v1636 = vpop.f32.mrb[0].mxu0
    %v1637 = vadd.f32 %v1559, %v1636
    %1638 = vmatprep.mubr.f32.mxu0 0.0
    %1639 = vmatmul.mubr.f32.gmra.mrb[0].mxu0 %v1512
    %v1640 = vpop.f32.mrb[0].mxu0
    %v1641 = vadd.f32 %v1555, %v1640
    %v1642 = vpop.f32.mrb[0].mxu0
    %v1643 = vadd.f32 %v1559, %v1642
    %1644 = vmatprep.mubr.f32.mxu0 0.0
    %1645 = vmatmul.mubr.f32.gmra.mrb[0].mxu0 %v1513
    %v1646 = vpop.f32.mrb[0].mxu0
    %v1647 = vadd.f32 %v1555, %v1646
    %v1648 = vpop.f32.mrb[0].mxu0
    %v1649 = vadd.f32 %v1559, %v1648
    %1650 = vmatprep.mubr.f32.mxu0 0.0
    %1651 = vmatmul.mubr.f32.gmra.mrb[0].mxu0 %v1514
    %v1652 = vpop.f32.mrb[0].mxu0
    %v1653 = vadd.f32 %v1555, %v1652
    %v1654 = vpop.f32.mrb[0].mxu0
    %v1655 = vadd.f32 %v1559, %v1654
    %1656 = vmatprep.mubr.f32.mxu0 0.0
    %1657 = vmatmul.mubr.f32.gmra.mrb[0].mxu0 %v1515
    %v1658 = vpop.f32.mrb[0].mxu0
    %v1659 = vadd.f32 %v1555, %v1658
    %v1660 = vpop.f32.mrb[0].mxu0
    %v1661 = vadd.f32 %v1559, %v1660
    %1662 = vmatprep.mubr.f32.mxu0 0.0
    %1663 = vmatmul.mubr.f32.gmra.mrb[0].mxu0 %v1516
    %v1664 = vpop.f32.mrb[0].mxu0
    %v1665 = vadd.f32 %v1555, %v1664
    %v1666 = vpop.f32.mrb[0].mxu0
    %v1667 = vadd.f32 %v1559, %v1666
    %1668 = vmatprep.mubr.f32.mxu0 0.0
    %1669 = vmatmul.mubr.f32.gmra.mrb[0].mxu0 %v1517
    %v1670 = vpop.f32.mrb[0].mxu0
    %v1671 = vadd.f32 %v1555, %v1670
    %v1672 = vpop.f32.mrb[0].mxu0
    %v1673 = vadd.f32 %v1559, %v1672
    %1674 = vdwg.mxu0
    %v1675 = vcombine.low %v1629, %v1641
    %v1676 = vcombine.high %v1629, %v1641
    %v1678 = vunpack.c.l.s4 1983009808
    %v1679 = vunpack.c.0.s8 %v1678
    %v1680 = vlaneseq
    %v1681 = vshrl.u32 %v1680, 7
    %v1682 = vsub.s32 %v1679, %v1681
    %v1683 = vrot.slane %v1675, %v1682
    %v1685 = vunpack.c.l.s4 1983009808
    %v1686 = vunpack.c.0.s8 %v1685
    %v1687 = vlaneseq
    %v1688 = vshrl.u32 %v1687, 7
    %v1689 = vsub.s32 %v1686, %v1688
    %v1690 = vrot.slane %v1676, %v1689
    %v1691 = vcombine.low %v1635, %v1647
    %v1692 = vcombine.high %v1635, %v1647
    %v1694 = vunpack.c.l.s4 1983009808
    %v1695 = vunpack.c.0.s8 %v1694
    %v1696 = vlaneseq
    %v1697 = vshrl.u32 %v1696, 7
    %v1698 = vsub.s32 %v1695, %v1697
    %v1699 = vrot.slane %v1691, %v1698
    %v1701 = vunpack.c.l.s4 1983009808
    %v1702 = vunpack.c.0.s8 %v1701
    %v1703 = vlaneseq
    %v1704 = vshrl.u32 %v1703, 7
    %v1705 = vsub.s32 %v1702, %v1704
    %v1706 = vrot.slane %v1692, %v1705
    %v1707 = vcombine.low %v1653, %v1665
    %v1708 = vcombine.high %v1653, %v1665
    %v1710 = vunpack.c.l.s4 1983009808
    %v1711 = vunpack.c.0.s8 %v1710
    %v1712 = vlaneseq
    %v1713 = vshrl.u32 %v1712, 7
    %v1714 = vsub.s32 %v1711, %v1713
    %v1715 = vrot.slane %v1707, %v1714
    %v1717 = vunpack.c.l.s4 1983009808
    %v1718 = vunpack.c.0.s8 %v1717
    %v1719 = vlaneseq
    %v1720 = vshrl.u32 %v1719, 7
    %v1721 = vsub.s32 %v1718, %v1720
    %v1722 = vrot.slane %v1708, %v1721
    %v1723 = vcombine.low %v1659, %v1671
    %v1724 = vcombine.high %v1659, %v1671
    %v1726 = vunpack.c.l.s4 1983009808
    %v1727 = vunpack.c.0.s8 %v1726
    %v1728 = vlaneseq
    %v1729 = vshrl.u32 %v1728, 7
    %v1730 = vsub.s32 %v1727, %v1729
    %v1731 = vrot.slane %v1723, %v1730
    %v1733 = vunpack.c.l.s4 1983009808
    %v1734 = vunpack.c.0.s8 %v1733
    %v1735 = vlaneseq
    %v1736 = vshrl.u32 %v1735, 7
    %v1737 = vsub.s32 %v1734, %v1736
    %v1738 = vrot.slane %v1724, %v1737
    %v1739 = vcombine.low %v1683, %v1699
    %v1740 = vcombine.high %v1683, %v1699
    %v1742 = vunpack.c.l.s4 1934713408
    %v1743 = vunpack.c.0.s8 %v1742
    %v1744 = vlaneseq
    %v1745 = vshrl.u32 %v1744, 7
    %v1746 = vsub.s32 %v1743, %v1745
    %v1747 = vrot.slane %v1739, %v1746
    %v1749 = vunpack.c.l.s4 1934713408
    %v1750 = vunpack.c.0.s8 %v1749
    %v1751 = vlaneseq
    %v1752 = vshrl.u32 %v1751, 7
    %v1753 = vsub.s32 %v1750, %v1752
    %v1754 = vrot.slane %v1740, %v1753
    %v1755 = vcombine.low %v1690, %v1706
    %v1756 = vcombine.high %v1690, %v1706
    %v1758 = vunpack.c.l.s4 1934713408
    %v1759 = vunpack.c.0.s8 %v1758
    %v1760 = vlaneseq
    %v1761 = vshrl.u32 %v1760, 7
    %v1762 = vsub.s32 %v1759, %v1761
    %v1763 = vrot.slane %v1755, %v1762
    %v1765 = vunpack.c.l.s4 1934713408
    %v1766 = vunpack.c.0.s8 %v1765
    %v1767 = vlaneseq
    %v1768 = vshrl.u32 %v1767, 7
    %v1769 = vsub.s32 %v1766, %v1768
    %v1770 = vrot.slane %v1756, %v1769
    %v1771 = vcombine.low %v1715, %v1731
    %v1772 = vcombine.high %v1715, %v1731
    %v1774 = vunpack.c.l.s4 1934713408
    %v1775 = vunpack.c.0.s8 %v1774
    %v1776 = vlaneseq
    %v1777 = vshrl.u32 %v1776, 7
    %v1778 = vsub.s32 %v1775, %v1777
    %v1779 = vrot.slane %v1771, %v1778
    %v1781 = vunpack.c.l.s4 1934713408
    %v1782 = vunpack.c.0.s8 %v1781
    %v1783 = vlaneseq
    %v1784 = vshrl.u32 %v1783, 7
    %v1785 = vsub.s32 %v1782, %v1784
    %v1786 = vrot.slane %v1772, %v1785
    %v1787 = vcombine.low %v1722, %v1738
    %v1788 = vcombine.high %v1722, %v1738
    %v1790 = vunpack.c.l.s4 1934713408
    %v1791 = vunpack.c.0.s8 %v1790
    %v1792 = vlaneseq
    %v1793 = vshrl.u32 %v1792, 7
    %v1794 = vsub.s32 %v1791, %v1793
    %v1795 = vrot.slane %v1787, %v1794
    %v1797 = vunpack.c.l.s4 1934713408
    %v1798 = vunpack.c.0.s8 %v1797
    %v1799 = vlaneseq
    %v1800 = vshrl.u32 %v1799, 7
    %v1801 = vsub.s32 %v1798, %v1800
    %v1802 = vrot.slane %v1788, %v1801
    %v1803 = vcombine.low %v1747, %v1779
    %v1804 = vcombine.high %v1747, %v1779
    %v1805 = vcombine.low %v1754, %v1786
    %v1806 = vcombine.high %v1754, %v1786
    %v1807 = vcombine.low %v1763, %v1795
    %v1808 = vcombine.high %v1763, %v1795
    %v1809 = vcombine.low %v1770, %v1802
    %v1810 = vcombine.high %v1770, %v1802
    %v1811 = vcombine.low %v1631, %v1643
    %v1812 = vcombine.high %v1631, %v1643
    %v1814 = vunpack.c.l.s4 1983009808
    %v1815 = vunpack.c.0.s8 %v1814
    %v1816 = vlaneseq
    %v1817 = vshrl.u32 %v1816, 7
    %v1818 = vsub.s32 %v1815, %v1817
    %v1819 = vrot.slane %v1811, %v1818
    %v1821 = vunpack.c.l.s4 1983009808
    %v1822 = vunpack.c.0.s8 %v1821
    %v1823 = vlaneseq
    %v1824 = vshrl.u32 %v1823, 7
    %v1825 = vsub.s32 %v1822, %v1824
    %v1826 = vrot.slane %v1812, %v1825
    %v1827 = vcombine.low %v1637, %v1649
    %v1828 = vcombine.high %v1637, %v1649
    %v1830 = vunpack.c.l.s4 1983009808
    %v1831 = vunpack.c.0.s8 %v1830
    %v1832 = vlaneseq
    %v1833 = vshrl.u32 %v1832, 7
    %v1834 = vsub.s32 %v1831, %v1833
    %v1835 = vrot.slane %v1827, %v1834
    %v1837 = vunpack.c.l.s4 1983009808
    %v1838 = vunpack.c.0.s8 %v1837
    %v1839 = vlaneseq
    %v1840 = vshrl.u32 %v1839, 7
    %v1841 = vsub.s32 %v1838, %v1840
    %v1842 = vrot.slane %v1828, %v1841
    %v1843 = vcombine.low %v1655, %v1667
    %v1844 = vcombine.high %v1655, %v1667
    %v1846 = vunpack.c.l.s4 1983009808
    %v1847 = vunpack.c.0.s8 %v1846
    %v1848 = vlaneseq
    %v1849 = vshrl.u32 %v1848, 7
    %v1850 = vsub.s32 %v1847, %v1849
    %v1851 = vrot.slane %v1843, %v1850
    %v1853 = vunpack.c.l.s4 1983009808
    %v1854 = vunpack.c.0.s8 %v1853
    %v1855 = vlaneseq
    %v1856 = vshrl.u32 %v1855, 7
    %v1857 = vsub.s32 %v1854, %v1856
    %v1858 = vrot.slane %v1844, %v1857
    %v1859 = vcombine.low %v1661, %v1673
    %v1860 = vcombine.high %v1661, %v1673
    %v1862 = vunpack.c.l.s4 1983009808
    %v1863 = vunpack.c.0.s8 %v1862
    %v1864 = vlaneseq
    %v1865 = vshrl.u32 %v1864, 7
    %v1866 = vsub.s32 %v1863, %v1865
    %v1867 = vrot.slane %v1859, %v1866
    %v1869 = vunpack.c.l.s4 1983009808
    %v1870 = vunpack.c.0.s8 %v1869
    %v1871 = vlaneseq
    %v1872 = vshrl.u32 %v1871, 7
    %v1873 = vsub.s32 %v1870, %v1872
    %v1874 = vrot.slane %v1860, %v1873
    %v1875 = vcombine.low %v1819, %v1835
    %v1876 = vcombine.high %v1819, %v1835
    %v1878 = vunpack.c.l.s4 1934713408
    %v1879 = vunpack.c.0.s8 %v1878
    %v1880 = vlaneseq
    %v1881 = vshrl.u32 %v1880, 7
    %v1882 = vsub.s32 %v1879, %v1881
    %v1883 = vrot.slane %v1875, %v1882
    %v1885 = vunpack.c.l.s4 1934713408
    %v1886 = vunpack.c.0.s8 %v1885
    %v1887 = vlaneseq
    %v1888 = vshrl.u32 %v1887, 7
    %v1889 = vsub.s32 %v1886, %v1888
    %v1890 = vrot.slane %v1876, %v1889
    %v1891 = vcombine.low %v1826, %v1842
    %v1892 = vcombine.high %v1826, %v1842
    %v1894 = vunpack.c.l.s4 1934713408
    %v1895 = vunpack.c.0.s8 %v1894
    %v1896 = vlaneseq
    %v1897 = vshrl.u32 %v1896, 7
    %v1898 = vsub.s32 %v1895, %v1897
    %v1899 = vrot.slane %v1891, %v1898
    %v1901 = vunpack.c.l.s4 1934713408
    %v1902 = vunpack.c.0.s8 %v1901
    %v1903 = vlaneseq
    %v1904 = vshrl.u32 %v1903, 7
    %v1905 = vsub.s32 %v1902, %v1904
    %v1906 = vrot.slane %v1892, %v1905
    %v1907 = vcombine.low %v1851, %v1867
    %v1908 = vcombine.high %v1851, %v1867
    %v1910 = vunpack.c.l.s4 1934713408
    %v1911 = vunpack.c.0.s8 %v1910
    %v1912 = vlaneseq
    %v1913 = vshrl.u32 %v1912, 7
    %v1914 = vsub.s32 %v1911, %v1913
    %v1915 = vrot.slane %v1907, %v1914
    %v1917 = vunpack.c.l.s4 1934713408
    %v1918 = vunpack.c.0.s8 %v1917
    %v1919 = vlaneseq
    %v1920 = vshrl.u32 %v1919, 7
    %v1921 = vsub.s32 %v1918, %v1920
    %v1922 = vrot.slane %v1908, %v1921
    %v1923 = vcombine.low %v1858, %v1874
    %v1924 = vcombine.high %v1858, %v1874
    %v1926 = vunpack.c.l.s4 1934713408
    %v1927 = vunpack.c.0.s8 %v1926
    %v1928 = vlaneseq
    %v1929 = vshrl.u32 %v1928, 7
    %v1930 = vsub.s32 %v1927, %v1929
    %v1931 = vrot.slane %v1923, %v1930
    %v1933 = vunpack.c.l.s4 1934713408
    %v1934 = vunpack.c.0.s8 %v1933
    %v1935 = vlaneseq
    %v1936 = vshrl.u32 %v1935, 7
    %v1937 = vsub.s32 %v1934, %v1936
    %v1938 = vrot.slane %v1924, %v1937
    %v1939 = vcombine.low %v1883, %v1915
    %v1940 = vcombine.high %v1883, %v1915
    %v1941 = vcombine.low %v1890, %v1922
    %v1942 = vcombine.high %v1890, %v1922
    %v1943 = vcombine.low %v1899, %v1931
    %v1944 = vcombine.high %v1899, %v1931
    %v1945 = vcombine.low %v1906, %v1938
    %v1946 = vcombine.high %v1906, %v1938
    %1947 = vst [vmem:[#allocation11] sm:$0xff] %v1803
    %1948 = vst [vmem:[#allocation11 + $0x8] sm:$0xff] %v1939
    %1949 = vst [vmem:[#allocation11 + $0x10] sm:$0xff] %v1804
    %1950 = vst [vmem:[#allocation11 + $0x18] sm:$0xff] %v1940
    %1951 = vst [vmem:[#allocation11 + $0x20] sm:$0xff] %v1805
    %1952 = vst [vmem:[#allocation11 + $0x28] sm:$0xff] %v1941
    %1953 = vst [vmem:[#allocation11 + $0x30] sm:$0xff] %v1806
    %1954 = vst [vmem:[#allocation11 + $0x38] sm:$0xff] %v1942
    %1955 = vst [vmem:[#allocation11 + $0x40] sm:$0xff] %v1807
    %1956 = vst [vmem:[#allocation11 + $0x48] sm:$0xff] %v1943
    %1957 = vst [vmem:[#allocation11 + $0x50] sm:$0xff] %v1808
    %1958 = vst [vmem:[#allocation11 + $0x58] sm:$0xff] %v1944
    %1959 = vst [vmem:[#allocation11 + $0x60] sm:$0xff] %v1809
    %1960 = vst [vmem:[#allocation11 + $0x68] sm:$0xff] %v1945
    %1961 = vst [vmem:[#allocation11 + $0x70] sm:$0xff] %v1810
    %1962 = vst [vmem:[#allocation11 + $0x78] sm:$0xff] %v1946
    // Predicated region
    $region34: #{tpu_custom_call.1} parent=1 // pred_check
      _
    $region35: #{tpu_custom_call.1} parent=1 // pred_check_branch
      %1964 = sbr.rel (0) target = $region37
    $region36: #{tpu_custom_call.1} parent=1 // pred_region
      %s1966 = ssub.s32 2048, 2048
      %1967 = vsyncadd [#allocation7], %s1966
      %s1968 = sshll.u32 [#allocation11], 4
      %s1969 = int_to_ptr.vmem [resolvable:$true] %s1968
      %1974 = dma.vmem_to_hbm [thread:$0]  %s1969, 2048, %s4, [#allocation7], 256, 256, 16
    $region37: #{tpu_custom_call.1} parent=1 // pred_fallthru
      _
    // Predicated region
    $region38: #{tpu_custom_call.1} parent=1 // pred_check
      _
    $region39: #{tpu_custom_call.1} parent=1 // pred_check_branch
      %1976 = sbr.rel (0) target = $region41
    $region40: #{tpu_custom_call.1} parent=1 // pred_region
      %1977 = dma.done [#allocation7], 2048
    $region41: #{tpu_custom_call.1} parent=1 // pred_fallthru
      _
    %1978 = vsyncpa [#allocation6], 1
    %1979 = vsyncpa [#allocation9], 1
    %1980 = vsyncpa [#allocation7], 1

</llo_original>
